<compile_context>
chip_gen: v7x
topology: tpu7x:2x2x1
jax: 0.10.0
libtpu: 0.0.40
codegen_flags: <defaults>
</compile_context>

<pallas_src>
import functools
import math

import numpy as np
import jax
import jax.numpy as jnp
from jax.experimental import pallas as pl
from jax.experimental.pallas import tpu as pltpu

# ---------------- small synthetic config ----------------
VOCAB = 64
HIDDEN = 32
INTER = 64
N_HEADS = 4
N_KV_HEADS = 2
HEAD_DIM = HIDDEN // N_HEADS          # 8
N_LAYERS = 2
SLIDING_WINDOW = 4
ROPE_THETA = 10000.0
RMS_EPS = 1e-6
BATCH = 2
SEQ = 8

Q_WIDTH = N_HEADS * HEAD_DIM          # 32
KV_WIDTH = N_KV_HEADS * HEAD_DIM      # 16
QKV_WIDTH = Q_WIDTH + 2 * KV_WIDTH    # 64
GROUPS = N_HEADS // N_KV_HEADS        # 2
NEG_INF = -1e30                       # finite "masked" value (safer than -inf)


def _round_up(x, m):
    return (x + m - 1) // m * m


# lane-dense output slab: [embeddings | h_layer1 | ... | h_layerL | final_norm]
OUT_WIDTH = _round_up((N_LAYERS + 2) * HIDDEN, 128)   # = 128 here


def _rmsnorm(x, w, eps):
    var = jnp.mean(x * x, axis=-1, keepdims=True)
    return (x * jax.lax.rsqrt(var + eps)) * w


# ---------------- fused whole-model kernel ----------------
def mistral_kernel(h0_ref, ln1_ref, wqkv_ref, wo_ref, ln2_ref, wgu_ref, wd_ref,
                   cos_ref, sin_ref, prot_ref, mask_ref, finw_ref, out_ref,
                   *, eps, scale, n_layers, n_heads, n_kv_heads, head_dim,
                   inter, out_pad):
    seq = h0_ref.shape[1]
    groups = n_heads // n_kv_heads
    q_w = n_heads * head_dim
    kv_w = n_kv_heads * head_dim

    h = h0_ref[0]                      # (S, HIDDEN)  embedding activations
    cos = cos_ref[...]                 # (S, QKV_WIDTH)  [c|c] per q/k head, 1 on v
    sin = sin_ref[...]                 # (S, QKV_WIDTH)  [s|s] per q/k head, 0 on v
    prot = prot_ref[...]               # (QKV_WIDTH, QKV_WIDTH) rotate_half perm
    mask = mask_ref[...]               # (groups*S, S) additive sliding-window mask

    pieces = [h]                       # layers_output[0] == embeddings

    for l in range(n_layers):          # statically unrolled layer chain
        # ---- input RMSNorm + fused QKV projection (one wide matmul) ----
        x = _rmsnorm(h, ln1_ref[l], eps)
        qkv = jnp.dot(x, wqkv_ref[l], preferred_element_type=jnp.float32)  # (S, 64)

        # ---- vectorized RoPE over the whole q|k|v slab (v cols unchanged) ----
        roped = qkv * cos + jnp.dot(qkv, prot,
                                    preferred_element_type=jnp.float32) * sin

        # ---- GQA attention, grouped by KV head (Q heads stacked on sublanes) ----
        head_outs = []
        for j in range(n_kv_heads):
            qg = jnp.concatenate(
                [roped[:, (j * groups + g) * head_dim:
                          (j * groups + g + 1) * head_dim]
                 for g in range(groups)], axis=0)                 # (groups*S, D)
            k = roped[:, q_w + j * head_dim: q_w + (j + 1) * head_dim]       # (S, D)
            v = qkv[:, q_w + kv_w + j * head_dim:
                       q_w + kv_w + (j + 1) * head_dim]                      # (S, D)

            s = jax.lax.dot_general(qg, k, (((1,), (1,)), ((), ())),
                                    preferred_element_type=jnp.float32)      # (gS, S)
            s = s * scale + mask
            m = jnp.max(s, axis=-1, keepdims=True)
            p = jnp.exp(s - m)
            p = p / jnp.sum(p, axis=-1, keepdims=True)            # exact softmax
            og = jnp.dot(p, v, preferred_element_type=jnp.float32)           # (gS, D)
            head_outs.extend(og[g * seq:(g + 1) * seq] for g in range(groups))

        attn = jnp.concatenate(head_outs, axis=-1)                # (S, HIDDEN)
        h = h + jnp.dot(attn, wo_ref[l], preferred_element_type=jnp.float32)

        # ---- post-attention RMSNorm + SwiGLU MLP (lane-dense gate|up) ----
        y = _rmsnorm(h, ln2_ref[l], eps)
        gu = jnp.dot(y, wgu_ref[l], preferred_element_type=jnp.float32)      # (S, 128)
        g = gu[:, :inter]
        u = gu[:, inter:]
        h = h + jnp.dot((g * jax.nn.sigmoid(g)) * u, wd_ref[l],
                        preferred_element_type=jnp.float32)

        pieces.append(h)               # per-layer output

    pieces.append(_rmsnorm(h, finw_ref[...], eps))                # final RMSNorm
    if out_pad:
        pieces.append(jnp.zeros((seq, out_pad), jnp.float32))

    out_ref[0] = jnp.concatenate(pieces, axis=-1)  # single lane-dense (S, 128) store


# ---------------- wrapper ----------------
def model_forward(input_ids, params, cos_slab, sin_slab, prot, mask_tiled):
    # Embedding lookup is a token-id gather; done with plain JAX outside the kernel.
    hidden0 = jnp.take(params["embed"], input_ids, axis=0)        # (B, S, H) f32
    B, S, H = hidden0.shape
    L = params["wqkv"].shape[0]
    out_pad = OUT_WIDTH - (L + 2) * H

    kern = functools.partial(
        mistral_kernel, eps=RMS_EPS, scale=1.0 / math.sqrt(HEAD_DIM),
        n_layers=L, n_heads=N_HEADS, n_kv_heads=N_KV_HEADS,
        head_dim=HEAD_DIM, inter=INTER, out_pad=out_pad)

    def shared(arr):
        # full-array block, constant index_map -> VMEM-resident across grid steps
        n = arr.ndim
        return pl.BlockSpec(tuple(arr.shape), lambda b, _n=n: (0,) * _n)

    out = pl.pallas_call(
        kern,
        out_shape=jax.ShapeDtypeStruct((B, S, OUT_WIDTH), jnp.float32),
        grid=(B,),
        in_specs=[
            pl.BlockSpec((1, S, H), lambda b: (b, 0, 0)),         # hidden0
            shared(params["ln1"]),                                # (L, 1, H)
            shared(params["wqkv"]),                               # (L, H, 64)
            shared(params["wo"]),                                 # (L, H, H)
            shared(params["ln2"]),                                # (L, 1, H)
            shared(params["wgu"]),                                # (L, H, 128)
            shared(params["wd"]),                                 # (L, INTER, H)
            shared(cos_slab),                                     # (S, 64)
            shared(sin_slab),                                     # (S, 64)
            shared(prot),                                         # (64, 64)
            shared(mask_tiled),                                   # (GROUPS*S, S)
            shared(params["final_w"]),                            # (1, H)
        ],
        out_specs=pl.BlockSpec((1, S, OUT_WIDTH), lambda b: (b, 0, 0)),
        compiler_params=pltpu.CompilerParams(
            dimension_semantics=("parallel",)),                   # batch -> 2 TCs on v7x
    )(hidden0, params["ln1"], params["wqkv"], params["wo"], params["ln2"],
      params["wgu"], params["wd"], cos_slab, sin_slab, prot, mask_tiled,
      params["final_w"])

    # slice the lane-dense slab back into the reference outputs
    layers_output = [out[:, :, 0:H]] + [out[:, :, (l + 1) * H:(l + 2) * H]
                                        for l in range(L)]
    final_out = out[:, :, (L + 1) * H:(L + 2) * H]
    return final_out, layers_output


# ---------------- parameter / table setup (plain JAX / numpy) ----------------
def init_params(key):
    keys = jax.random.split(key, 1 + N_LAYERS)
    s = 0.02
    embed = jax.random.normal(keys[0], (VOCAB, HIDDEN), jnp.float32) * s
    ln1, ln2, wqkv, wo, wgu, wd = [], [], [], [], [], []
    for lk in keys[1:]:
        ks = jax.random.split(lk, 7)
        # weights stored as (in_features, out_features) == x @ W
        wq = jax.random.normal(ks[0], (HIDDEN, Q_WIDTH), jnp.float32) * s
        wk = jax.random.normal(ks[1], (HIDDEN, KV_WIDTH), jnp.float32) * s
        wv = jax.random.normal(ks[2], (HIDDEN, KV_WIDTH), jnp.float32) * s
        wo_l = jax.random.normal(ks[3], (Q_WIDTH, HIDDEN), jnp.float32) * s
        wg = jax.random.normal(ks[4], (HIDDEN, INTER), jnp.float32) * s
        wu = jax.random.normal(ks[5], (HIDDEN, INTER), jnp.float32) * s
        wd_l = jax.random.normal(ks[6], (INTER, HIDDEN), jnp.float32) * s
        ln1.append(jnp.ones((1, HIDDEN), jnp.float32))
        ln2.append(jnp.ones((1, HIDDEN), jnp.float32))
        wqkv.append(jnp.concatenate([wq, wk, wv], axis=1))        # (H, 64)  q|k|v
        wo.append(wo_l)
        wgu.append(jnp.concatenate([wg, wu], axis=1))             # (H, 128) gate|up
        wd.append(wd_l)
    stack = lambda xs: jnp.stack(xs, axis=0)
    return dict(embed=embed,
                ln1=stack(ln1), ln2=stack(ln2),
                wqkv=stack(wqkv), wo=stack(wo),
                wgu=stack(wgu), wd=stack(wd),
                final_w=jnp.ones((1, HIDDEN), jnp.float32))


def build_rope_tables(seq_len, head_dim, theta):
    """Full-width cos/sin slabs over the q|k|v projection, plus the rotate_half
    signed-permutation matrix (block-diagonal per q/k head, zero over v cols)."""
    half = head_dim // 2
    inv_freq = 1.0 / (theta ** (jnp.arange(0, head_dim, 2, dtype=jnp.float32)
                                / head_dim))
    t = jnp.arange(seq_len, dtype=jnp.float32)
    freqs = jnp.outer(t, inv_freq)                        # (S, half)
    cos_h, sin_h = jnp.cos(freqs), jnp.sin(freqs)
    cos_head = jnp.concatenate([cos_h, cos_h], axis=-1)   # (S, D) = [c|c]
    sin_head = jnp.concatenate([sin_h, sin_h], axis=-1)   # (S, D) = [s|s]

    n_qk_heads = N_HEADS + N_KV_HEADS
    cos_slab = jnp.concatenate(
        [jnp.tile(cos_head, (1, n_qk_heads)),
         jnp.ones((seq_len, KV_WIDTH), jnp.float32)], axis=-1)    # (S, 64)
    sin_slab = jnp.concatenate(
        [jnp.tile(sin_head, (1, n_qk_heads)),
         jnp.zeros((seq_len, KV_WIDTH), jnp.float32)], axis=-1)   # (S, 64)

    prot = np.zeros((QKV_WIDTH, QKV_WIDTH), np.float32)
    for hh in range(n_qk_heads):
        o = hh * head_dim
        for k in range(half):
            prot[o + half + k, o + k] = -1.0      # rotate_half: first half gets -x2
            prot[o + k, o + half + k] = 1.0       #              second half gets x1
    return cos_slab, sin_slab, jnp.asarray(prot)


def make_sliding_mask(seq_len, window):
    i = jnp.arange(seq_len)[:, None]
    j = jnp.arange(seq_len)[None, :]
    allowed = (j <= i) & (j > i - window)
    return jnp.where(allowed, 0.0, NEG_INF).astype(jnp.float32)


if __name__ == "__main__":
    key = jax.random.PRNGKey(0)
    k_params, k_ids = jax.random.split(key)

    params = init_params(k_params)
    cos_slab, sin_slab, prot = build_rope_tables(SEQ, HEAD_DIM, ROPE_THETA)
    mask_tiled = jnp.tile(make_sliding_mask(SEQ, SLIDING_WINDOW), (GROUPS, 1))
    input_ids = jax.random.randint(k_ids, (BATCH, SEQ), 0, VOCAB)

    final_out, layers_output = model_forward(input_ids, params, cos_slab,
                                             sin_slab, prot, mask_tiled)
    jax.block_until_ready(final_out)
    for h in layers_output:
        jax.block_until_ready(h)
    print("KERNEL_OK")
</pallas_src>

<mosaic_0001>
module attributes {stable_mosaic.version = 11 : i64} {
  func.func @mistral_kernel(%arg0: i32, %arg1: memref<1x8x32xf32, #tpu.memory_space<vmem>>, %arg2: memref<2x1x32xf32, #tpu.memory_space<vmem>>, %arg3: memref<2x32x64xf32, #tpu.memory_space<vmem>>, %arg4: memref<2x32x32xf32, #tpu.memory_space<vmem>>, %arg5: memref<2x1x32xf32, #tpu.memory_space<vmem>>, %arg6: memref<2x32x128xf32, #tpu.memory_space<vmem>>, %arg7: memref<2x64x32xf32, #tpu.memory_space<vmem>>, %arg8: memref<8x64xf32, #tpu.memory_space<vmem>>, %arg9: memref<8x64xf32, #tpu.memory_space<vmem>>, %arg10: memref<64x64xf32, #tpu.memory_space<vmem>>, %arg11: memref<16x8xf32, #tpu.memory_space<vmem>>, %arg12: memref<1x32xf32, #tpu.memory_space<vmem>>, %arg13: memref<1x8x128xf32, #tpu.memory_space<vmem>>) attributes {dimension_semantics = [#tpu.dimension_semantics<parallel>], iteration_bounds = array<i64: 2>, scalar_prefetch = 0 : i64, scratch_operands = 0 : i64, tpu.core_type = #tpu.core_type<tc>, window_params = [{transform_indices = @transform_0, window_bounds = array<i64: 1, 8, 32>}, {pipeline_mode = #tpu.pipeline_mode<synchronous>, transform_indices = @transform_1, window_bounds = array<i64: 2, 1, 32>}, {pipeline_mode = #tpu.pipeline_mode<synchronous>, transform_indices = @transform_2, window_bounds = array<i64: 2, 32, 64>}, {pipeline_mode = #tpu.pipeline_mode<synchronous>, transform_indices = @transform_3, window_bounds = array<i64: 2, 32, 32>}, {pipeline_mode = #tpu.pipeline_mode<synchronous>, transform_indices = @transform_4, window_bounds = array<i64: 2, 1, 32>}, {pipeline_mode = #tpu.pipeline_mode<synchronous>, transform_indices = @transform_5, window_bounds = array<i64: 2, 32, 128>}, {pipeline_mode = #tpu.pipeline_mode<synchronous>, transform_indices = @transform_6, window_bounds = array<i64: 2, 64, 32>}, {pipeline_mode = #tpu.pipeline_mode<synchronous>, transform_indices = @transform_7, window_bounds = array<i64: 8, 64>}, {pipeline_mode = #tpu.pipeline_mode<synchronous>, transform_indices = @transform_8, window_bounds = array<i64: 8, 64>}, {pipeline_mode = #tpu.pipeline_mode<synchronous>, transform_indices = @transform_9, window_bounds = array<i64: 64, 64>}, {pipeline_mode = #tpu.pipeline_mode<synchronous>, transform_indices = @transform_10, window_bounds = array<i64: 16, 8>}, {pipeline_mode = #tpu.pipeline_mode<synchronous>, transform_indices = @transform_11, window_bounds = array<i64: 1, 32>}, {transform_indices = @transform_12, window_bounds = array<i64: 1, 8, 128>}]} {
    %c0 = arith.constant 0 : index
    %c0_0 = arith.constant 0 : index
    %c0_1 = arith.constant 0 : index
    %0 = vector.load %arg1[%c0, %c0_0, %c0_1] : memref<1x8x32xf32, #tpu.memory_space<vmem>>, vector<1x8x32xf32>
    %1 = vector.shape_cast %0 : vector<1x8x32xf32> to vector<8x32xf32>
    %c0_2 = arith.constant 0 : index
    %c0_3 = arith.constant 0 : index
    %2 = vector.load %arg8[%c0_2, %c0_3] : memref<8x64xf32, #tpu.memory_space<vmem>>, vector<8x64xf32>
    %c0_4 = arith.constant 0 : index
    %c0_5 = arith.constant 0 : index
    %3 = vector.load %arg9[%c0_4, %c0_5] : memref<8x64xf32, #tpu.memory_space<vmem>>, vector<8x64xf32>
    %c0_6 = arith.constant 0 : index
    %c0_7 = arith.constant 0 : index
    %4 = vector.load %arg10[%c0_6, %c0_7] : memref<64x64xf32, #tpu.memory_space<vmem>>, vector<64x64xf32>
    %c0_8 = arith.constant 0 : index
    %c0_9 = arith.constant 0 : index
    %5 = vector.load %arg11[%c0_8, %c0_9] : memref<16x8xf32, #tpu.memory_space<vmem>>, vector<16x8xf32>
    %c0_10 = arith.constant 0 : index
    %c0_11 = arith.constant 0 : index
    %c0_12 = arith.constant 0 : index
    %6 = vector.load %arg2[%c0_10, %c0_11, %c0_12] : memref<2x1x32xf32, #tpu.memory_space<vmem>>, vector<1x1x32xf32>
    %7 = vector.shape_cast %6 : vector<1x1x32xf32> to vector<1x32xf32>
    %8 = arith.mulf %1, %1 : vector<8x32xf32>
    %cst = arith.constant dense<0.000000e+00> : vector<8xf32>
    %9 = vector.multi_reduction <add>, %8, %cst [1] : vector<8x32xf32> to vector<8xf32>
    %10 = vector.shape_cast %9 : vector<8xf32> to vector<8x1xf32>
    %cst_13 = arith.constant 3.200000e+01 : f32
    %11 = vector.broadcast %cst_13 : f32 to vector<8x1xf32>
    %12 = arith.divf %10, %11 : vector<8x1xf32>
    %cst_14 = arith.constant 9.99999997E-7 : f32
    %13 = vector.broadcast %cst_14 : f32 to vector<8x1xf32>
    %14 = arith.addf %12, %13 : vector<8x1xf32>
    %15 = math.rsqrt %14 : vector<8x1xf32>
    %16 = vector.broadcast %15 : vector<8x1xf32> to vector<8x32xf32>
    %17 = arith.mulf %1, %16 : vector<8x32xf32>
    %18 = vector.broadcast %7 : vector<1x32xf32> to vector<8x32xf32>
    %19 = arith.mulf %17, %18 : vector<8x32xf32>
    %c0_15 = arith.constant 0 : index
    %c0_16 = arith.constant 0 : index
    %c0_17 = arith.constant 0 : index
    %20 = vector.load %arg3[%c0_15, %c0_16, %c0_17] : memref<2x32x64xf32, #tpu.memory_space<vmem>>, vector<1x32x64xf32>
    %21 = vector.shape_cast %20 : vector<1x32x64xf32> to vector<32x64xf32>
    %cst_18 = arith.constant dense<0.000000e+00> : vector<8x64xf32>
    %22 = tpu.matmul %19, %21, %cst_18 {dimension_numbers = #tpu.dot_dimension_numbers<[1], [0], [0], [1], [0, 0, 1, 1], [], []>} : vector<8x32xf32>, vector<32x64xf32>, vector<8x64xf32> -> vector<8x64xf32>
    %23 = arith.mulf %22, %2 : vector<8x64xf32>
    %cst_19 = arith.constant dense<0.000000e+00> : vector<8x64xf32>
    %24 = tpu.matmul %22, %4, %cst_19 {dimension_numbers = #tpu.dot_dimension_numbers<[1], [0], [0], [1], [0, 0, 1, 1], [], []>} : vector<8x64xf32>, vector<64x64xf32>, vector<8x64xf32> -> vector<8x64xf32>
    %25 = arith.mulf %24, %3 : vector<8x64xf32>
    %26 = arith.addf %23, %25 : vector<8x64xf32>
    %27 = vector.extract_strided_slice %26 {offsets = [0, 0], sizes = [8, 8], strides = [1, 1]} : vector<8x64xf32> to vector<8x8xf32>
    %28 = vector.extract_strided_slice %26 {offsets = [0, 8], sizes = [8, 8], strides = [1, 1]} : vector<8x64xf32> to vector<8x8xf32>
    %29 = tpu.concatenate %27, %28 in 0 : vector<8x8xf32>, vector<8x8xf32> -> vector<16x8xf32>
    %30 = vector.extract_strided_slice %26 {offsets = [0, 32], sizes = [8, 8], strides = [1, 1]} : vector<8x64xf32> to vector<8x8xf32>
    %31 = vector.extract_strided_slice %22 {offsets = [0, 48], sizes = [8, 8], strides = [1, 1]} : vector<8x64xf32> to vector<8x8xf32>
    %cst_20 = arith.constant dense<0.000000e+00> : vector<16x8xf32>
    %32 = tpu.matmul %29, %30, %cst_20 {dimension_numbers = #tpu.dot_dimension_numbers<[1], [1], [0], [0], [0, 0, 1, 0], [], []>} : vector<16x8xf32>, vector<8x8xf32>, vector<16x8xf32> -> vector<16x8xf32>
    %cst_21 = arith.constant 0.353553385 : f32
    %33 = vector.broadcast %cst_21 : f32 to vector<16x8xf32>
    %34 = arith.mulf %32, %33 : vector<16x8xf32>
    %35 = arith.addf %34, %5 : vector<16x8xf32>
    %cst_22 = arith.constant dense<0xFF800000> : vector<16xf32>
    %36 = vector.multi_reduction <maximumf>, %35, %cst_22 [1] : vector<16x8xf32> to vector<16xf32>
    %37 = vector.shape_cast %36 : vector<16xf32> to vector<16x1xf32>
    %38 = vector.broadcast %37 : vector<16x1xf32> to vector<16x8xf32>
    %39 = arith.subf %35, %38 : vector<16x8xf32>
    %40 = math.exp %39 : vector<16x8xf32>
    %cst_23 = arith.constant dense<0.000000e+00> : vector<16xf32>
    %41 = vector.multi_reduction <add>, %40, %cst_23 [1] : vector<16x8xf32> to vector<16xf32>
    %42 = vector.shape_cast %41 : vector<16xf32> to vector<16x1xf32>
    %43 = vector.broadcast %42 : vector<16x1xf32> to vector<16x8xf32>
    %44 = arith.divf %40, %43 : vector<16x8xf32>
    %cst_24 = arith.constant dense<0.000000e+00> : vector<16x8xf32>
    %45 = tpu.matmul %44, %31, %cst_24 {dimension_numbers = #tpu.dot_dimension_numbers<[1], [0], [0], [1], [0, 0, 1, 1], [], []>} : vector<16x8xf32>, vector<8x8xf32>, vector<16x8xf32> -> vector<16x8xf32>
    %46 = vector.extract_strided_slice %45 {offsets = [0, 0], sizes = [8, 8], strides = [1, 1]} : vector<16x8xf32> to vector<8x8xf32>
    %47 = vector.extract_strided_slice %45 {offsets = [8, 0], sizes = [8, 8], strides = [1, 1]} : vector<16x8xf32> to vector<8x8xf32>
    %48 = vector.extract_strided_slice %26 {offsets = [0, 16], sizes = [8, 8], strides = [1, 1]} : vector<8x64xf32> to vector<8x8xf32>
    %49 = vector.extract_strided_slice %26 {offsets = [0, 24], sizes = [8, 8], strides = [1, 1]} : vector<8x64xf32> to vector<8x8xf32>
    %50 = tpu.concatenate %48, %49 in 0 : vector<8x8xf32>, vector<8x8xf32> -> vector<16x8xf32>
    %51 = vector.extract_strided_slice %26 {offsets = [0, 40], sizes = [8, 8], strides = [1, 1]} : vector<8x64xf32> to vector<8x8xf32>
    %52 = vector.extract_strided_slice %22 {offsets = [0, 56], sizes = [8, 8], strides = [1, 1]} : vector<8x64xf32> to vector<8x8xf32>
    %cst_25 = arith.constant dense<0.000000e+00> : vector<16x8xf32>
    %53 = tpu.matmul %50, %51, %cst_25 {dimension_numbers = #tpu.dot_dimension_numbers<[1], [1], [0], [0], [0, 0, 1, 0], [], []>} : vector<16x8xf32>, vector<8x8xf32>, vector<16x8xf32> -> vector<16x8xf32>
    %cst_26 = arith.constant 0.353553385 : f32
    %54 = vector.broadcast %cst_26 : f32 to vector<16x8xf32>
    %55 = arith.mulf %53, %54 : vector<16x8xf32>
    %56 = arith.addf %55, %5 : vector<16x8xf32>
    %cst_27 = arith.constant dense<0xFF800000> : vector<16xf32>
    %57 = vector.multi_reduction <maximumf>, %56, %cst_27 [1] : vector<16x8xf32> to vector<16xf32>
    %58 = vector.shape_cast %57 : vector<16xf32> to vector<16x1xf32>
    %59 = vector.broadcast %58 : vector<16x1xf32> to vector<16x8xf32>
    %60 = arith.subf %56, %59 : vector<16x8xf32>
    %61 = math.exp %60 : vector<16x8xf32>
    %cst_28 = arith.constant dense<0.000000e+00> : vector<16xf32>
    %62 = vector.multi_reduction <add>, %61, %cst_28 [1] : vector<16x8xf32> to vector<16xf32>
    %63 = vector.shape_cast %62 : vector<16xf32> to vector<16x1xf32>
    %64 = vector.broadcast %63 : vector<16x1xf32> to vector<16x8xf32>
    %65 = arith.divf %61, %64 : vector<16x8xf32>
    %cst_29 = arith.constant dense<0.000000e+00> : vector<16x8xf32>
    %66 = tpu.matmul %65, %52, %cst_29 {dimension_numbers = #tpu.dot_dimension_numbers<[1], [0], [0], [1], [0, 0, 1, 1], [], []>} : vector<16x8xf32>, vector<8x8xf32>, vector<16x8xf32> -> vector<16x8xf32>
    %67 = vector.extract_strided_slice %66 {offsets = [0, 0], sizes = [8, 8], strides = [1, 1]} : vector<16x8xf32> to vector<8x8xf32>
    %68 = vector.extract_strided_slice %66 {offsets = [8, 0], sizes = [8, 8], strides = [1, 1]} : vector<16x8xf32> to vector<8x8xf32>
    %69 = tpu.concatenate %46, %47, %67, %68 in 1 : vector<8x8xf32>, vector<8x8xf32>, vector<8x8xf32>, vector<8x8xf32> -> vector<8x32xf32>
    %c0_30 = arith.constant 0 : index
    %c0_31 = arith.constant 0 : index
    %c0_32 = arith.constant 0 : index
    %70 = vector.load %arg4[%c0_30, %c0_31, %c0_32] : memref<2x32x32xf32, #tpu.memory_space<vmem>>, vector<1x32x32xf32>
    %71 = vector.shape_cast %70 : vector<1x32x32xf32> to vector<32x32xf32>
    %cst_33 = arith.constant dense<0.000000e+00> : vector<8x32xf32>
    %72 = tpu.matmul %69, %71, %cst_33 {dimension_numbers = #tpu.dot_dimension_numbers<[1], [0], [0], [1], [0, 0, 1, 1], [], []>} : vector<8x32xf32>, vector<32x32xf32>, vector<8x32xf32> -> vector<8x32xf32>
    %73 = arith.addf %1, %72 : vector<8x32xf32>
    %c0_34 = arith.constant 0 : index
    %c0_35 = arith.constant 0 : index
    %c0_36 = arith.constant 0 : index
    %74 = vector.load %arg5[%c0_34, %c0_35, %c0_36] : memref<2x1x32xf32, #tpu.memory_space<vmem>>, vector<1x1x32xf32>
    %75 = vector.shape_cast %74 : vector<1x1x32xf32> to vector<1x32xf32>
    %76 = arith.mulf %73, %73 : vector<8x32xf32>
    %cst_37 = arith.constant dense<0.000000e+00> : vector<8xf32>
    %77 = vector.multi_reduction <add>, %76, %cst_37 [1] : vector<8x32xf32> to vector<8xf32>
    %78 = vector.shape_cast %77 : vector<8xf32> to vector<8x1xf32>
    %cst_38 = arith.constant 3.200000e+01 : f32
    %79 = vector.broadcast %cst_38 : f32 to vector<8x1xf32>
    %80 = arith.divf %78, %79 : vector<8x1xf32>
    %cst_39 = arith.constant 9.99999997E-7 : f32
    %81 = vector.broadcast %cst_39 : f32 to vector<8x1xf32>
    %82 = arith.addf %80, %81 : vector<8x1xf32>
    %83 = math.rsqrt %82 : vector<8x1xf32>
    %84 = vector.broadcast %83 : vector<8x1xf32> to vector<8x32xf32>
    %85 = arith.mulf %73, %84 : vector<8x32xf32>
    %86 = vector.broadcast %75 : vector<1x32xf32> to vector<8x32xf32>
    %87 = arith.mulf %85, %86 : vector<8x32xf32>
    %c0_40 = arith.constant 0 : index
    %c0_41 = arith.constant 0 : index
    %c0_42 = arith.constant 0 : index
    %88 = vector.load %arg6[%c0_40, %c0_41, %c0_42] : memref<2x32x128xf32, #tpu.memory_space<vmem>>, vector<1x32x128xf32>
    %89 = vector.shape_cast %88 : vector<1x32x128xf32> to vector<32x128xf32>
    %cst_43 = arith.constant dense<0.000000e+00> : vector<8x128xf32>
    %90 = tpu.matmul %87, %89, %cst_43 {dimension_numbers = #tpu.dot_dimension_numbers<[1], [0], [0], [1], [0, 0, 1, 1], [], []>} : vector<8x32xf32>, vector<32x128xf32>, vector<8x128xf32> -> vector<8x128xf32>
    %91 = vector.extract_strided_slice %90 {offsets = [0, 0], sizes = [8, 64], strides = [1, 1]} : vector<8x128xf32> to vector<8x64xf32>
    %92 = vector.extract_strided_slice %90 {offsets = [0, 64], sizes = [8, 64], strides = [1, 1]} : vector<8x128xf32> to vector<8x64xf32>
    %93 = arith.negf %91 : vector<8x64xf32>
    %94 = math.exp %93 : vector<8x64xf32>
    %cst_44 = arith.constant 1.000000e+00 : f32
    %95 = vector.broadcast %cst_44 : f32 to vector<8x64xf32>
    %96 = arith.addf %95, %94 : vector<8x64xf32>
    %97 = arith.divf %95, %96 : vector<8x64xf32>
    %98 = arith.mulf %91, %97 : vector<8x64xf32>
    %99 = arith.mulf %98, %92 : vector<8x64xf32>
    %c0_45 = arith.constant 0 : index
    %c0_46 = arith.constant 0 : index
    %c0_47 = arith.constant 0 : index
    %100 = vector.load %arg7[%c0_45, %c0_46, %c0_47] : memref<2x64x32xf32, #tpu.memory_space<vmem>>, vector<1x64x32xf32>
    %101 = vector.shape_cast %100 : vector<1x64x32xf32> to vector<64x32xf32>
    %cst_48 = arith.constant dense<0.000000e+00> : vector<8x32xf32>
    %102 = tpu.matmul %99, %101, %cst_48 {dimension_numbers = #tpu.dot_dimension_numbers<[1], [0], [0], [1], [0, 0, 1, 1], [], []>} : vector<8x64xf32>, vector<64x32xf32>, vector<8x32xf32> -> vector<8x32xf32>
    %103 = arith.addf %73, %102 : vector<8x32xf32>
    %c1 = arith.constant 1 : index
    %c0_49 = arith.constant 0 : index
    %c0_50 = arith.constant 0 : index
    %104 = vector.load %arg2[%c1, %c0_49, %c0_50] : memref<2x1x32xf32, #tpu.memory_space<vmem>>, vector<1x1x32xf32>
    %105 = vector.shape_cast %104 : vector<1x1x32xf32> to vector<1x32xf32>
    %106 = arith.mulf %103, %103 : vector<8x32xf32>
    %cst_51 = arith.constant dense<0.000000e+00> : vector<8xf32>
    %107 = vector.multi_reduction <add>, %106, %cst_51 [1] : vector<8x32xf32> to vector<8xf32>
    %108 = vector.shape_cast %107 : vector<8xf32> to vector<8x1xf32>
    %cst_52 = arith.constant 3.200000e+01 : f32
    %109 = vector.broadcast %cst_52 : f32 to vector<8x1xf32>
    %110 = arith.divf %108, %109 : vector<8x1xf32>
    %cst_53 = arith.constant 9.99999997E-7 : f32
    %111 = vector.broadcast %cst_53 : f32 to vector<8x1xf32>
    %112 = arith.addf %110, %111 : vector<8x1xf32>
    %113 = math.rsqrt %112 : vector<8x1xf32>
    %114 = vector.broadcast %113 : vector<8x1xf32> to vector<8x32xf32>
    %115 = arith.mulf %103, %114 : vector<8x32xf32>
    %116 = vector.broadcast %105 : vector<1x32xf32> to vector<8x32xf32>
    %117 = arith.mulf %115, %116 : vector<8x32xf32>
    %c1_54 = arith.constant 1 : index
    %c0_55 = arith.constant 0 : index
    %c0_56 = arith.constant 0 : index
    %118 = vector.load %arg3[%c1_54, %c0_55, %c0_56] : memref<2x32x64xf32, #tpu.memory_space<vmem>>, vector<1x32x64xf32>
    %119 = vector.shape_cast %118 : vector<1x32x64xf32> to vector<32x64xf32>
    %cst_57 = arith.constant dense<0.000000e+00> : vector<8x64xf32>
    %120 = tpu.matmul %117, %119, %cst_57 {dimension_numbers = #tpu.dot_dimension_numbers<[1], [0], [0], [1], [0, 0, 1, 1], [], []>} : vector<8x32xf32>, vector<32x64xf32>, vector<8x64xf32> -> vector<8x64xf32>
    %121 = arith.mulf %120, %2 : vector<8x64xf32>
    %cst_58 = arith.constant dense<0.000000e+00> : vector<8x64xf32>
    %122 = tpu.matmul %120, %4, %cst_58 {dimension_numbers = #tpu.dot_dimension_numbers<[1], [0], [0], [1], [0, 0, 1, 1], [], []>} : vector<8x64xf32>, vector<64x64xf32>, vector<8x64xf32> -> vector<8x64xf32>
    %123 = arith.mulf %122, %3 : vector<8x64xf32>
    %124 = arith.addf %121, %123 : vector<8x64xf32>
    %125 = vector.extract_strided_slice %124 {offsets = [0, 0], sizes = [8, 8], strides = [1, 1]} : vector<8x64xf32> to vector<8x8xf32>
    %126 = vector.extract_strided_slice %124 {offsets = [0, 8], sizes = [8, 8], strides = [1, 1]} : vector<8x64xf32> to vector<8x8xf32>
    %127 = tpu.concatenate %125, %126 in 0 : vector<8x8xf32>, vector<8x8xf32> -> vector<16x8xf32>
    %128 = vector.extract_strided_slice %124 {offsets = [0, 32], sizes = [8, 8], strides = [1, 1]} : vector<8x64xf32> to vector<8x8xf32>
    %129 = vector.extract_strided_slice %120 {offsets = [0, 48], sizes = [8, 8], strides = [1, 1]} : vector<8x64xf32> to vector<8x8xf32>
    %cst_59 = arith.constant dense<0.000000e+00> : vector<16x8xf32>
    %130 = tpu.matmul %127, %128, %cst_59 {dimension_numbers = #tpu.dot_dimension_numbers<[1], [1], [0], [0], [0, 0, 1, 0], [], []>} : vector<16x8xf32>, vector<8x8xf32>, vector<16x8xf32> -> vector<16x8xf32>
    %cst_60 = arith.constant 0.353553385 : f32
    %131 = vector.broadcast %cst_60 : f32 to vector<16x8xf32>
    %132 = arith.mulf %130, %131 : vector<16x8xf32>
    %133 = arith.addf %132, %5 : vector<16x8xf32>
    %cst_61 = arith.constant dense<0xFF800000> : vector<16xf32>
    %134 = vector.multi_reduction <maximumf>, %133, %cst_61 [1] : vector<16x8xf32> to vector<16xf32>
    %135 = vector.shape_cast %134 : vector<16xf32> to vector<16x1xf32>
    %136 = vector.broadcast %135 : vector<16x1xf32> to vector<16x8xf32>
    %137 = arith.subf %133, %136 : vector<16x8xf32>
    %138 = math.exp %137 : vector<16x8xf32>
    %cst_62 = arith.constant dense<0.000000e+00> : vector<16xf32>
    %139 = vector.multi_reduction <add>, %138, %cst_62 [1] : vector<16x8xf32> to vector<16xf32>
    %140 = vector.shape_cast %139 : vector<16xf32> to vector<16x1xf32>
    %141 = vector.broadcast %140 : vector<16x1xf32> to vector<16x8xf32>
    %142 = arith.divf %138, %141 : vector<16x8xf32>
    %cst_63 = arith.constant dense<0.000000e+00> : vector<16x8xf32>
    %143 = tpu.matmul %142, %129, %cst_63 {dimension_numbers = #tpu.dot_dimension_numbers<[1], [0], [0], [1], [0, 0, 1, 1], [], []>} : vector<16x8xf32>, vector<8x8xf32>, vector<16x8xf32> -> vector<16x8xf32>
    %144 = vector.extract_strided_slice %143 {offsets = [0, 0], sizes = [8, 8], strides = [1, 1]} : vector<16x8xf32> to vector<8x8xf32>
    %145 = vector.extract_strided_slice %143 {offsets = [8, 0], sizes = [8, 8], strides = [1, 1]} : vector<16x8xf32> to vector<8x8xf32>
    %146 = vector.extract_strided_slice %124 {offsets = [0, 16], sizes = [8, 8], strides = [1, 1]} : vector<8x64xf32> to vector<8x8xf32>
    %147 = vector.extract_strided_slice %124 {offsets = [0, 24], sizes = [8, 8], strides = [1, 1]} : vector<8x64xf32> to vector<8x8xf32>
    %148 = tpu.concatenate %146, %147 in 0 : vector<8x8xf32>, vector<8x8xf32> -> vector<16x8xf32>
    %149 = vector.extract_strided_slice %124 {offsets = [0, 40], sizes = [8, 8], strides = [1, 1]} : vector<8x64xf32> to vector<8x8xf32>
    %150 = vector.extract_strided_slice %120 {offsets = [0, 56], sizes = [8, 8], strides = [1, 1]} : vector<8x64xf32> to vector<8x8xf32>
    %cst_64 = arith.constant dense<0.000000e+00> : vector<16x8xf32>
    %151 = tpu.matmul %148, %149, %cst_64 {dimension_numbers = #tpu.dot_dimension_numbers<[1], [1], [0], [0], [0, 0, 1, 0], [], []>} : vector<16x8xf32>, vector<8x8xf32>, vector<16x8xf32> -> vector<16x8xf32>
    %cst_65 = arith.constant 0.353553385 : f32
    %152 = vector.broadcast %cst_65 : f32 to vector<16x8xf32>
    %153 = arith.mulf %151, %152 : vector<16x8xf32>
    %154 = arith.addf %153, %5 : vector<16x8xf32>
    %cst_66 = arith.constant dense<0xFF800000> : vector<16xf32>
    %155 = vector.multi_reduction <maximumf>, %154, %cst_66 [1] : vector<16x8xf32> to vector<16xf32>
    %156 = vector.shape_cast %155 : vector<16xf32> to vector<16x1xf32>
    %157 = vector.broadcast %156 : vector<16x1xf32> to vector<16x8xf32>
    %158 = arith.subf %154, %157 : vector<16x8xf32>
    %159 = math.exp %158 : vector<16x8xf32>
    %cst_67 = arith.constant dense<0.000000e+00> : vector<16xf32>
    %160 = vector.multi_reduction <add>, %159, %cst_67 [1] : vector<16x8xf32> to vector<16xf32>
    %161 = vector.shape_cast %160 : vector<16xf32> to vector<16x1xf32>
    %162 = vector.broadcast %161 : vector<16x1xf32> to vector<16x8xf32>
    %163 = arith.divf %159, %162 : vector<16x8xf32>
    %cst_68 = arith.constant dense<0.000000e+00> : vector<16x8xf32>
    %164 = tpu.matmul %163, %150, %cst_68 {dimension_numbers = #tpu.dot_dimension_numbers<[1], [0], [0], [1], [0, 0, 1, 1], [], []>} : vector<16x8xf32>, vector<8x8xf32>, vector<16x8xf32> -> vector<16x8xf32>
    %165 = vector.extract_strided_slice %164 {offsets = [0, 0], sizes = [8, 8], strides = [1, 1]} : vector<16x8xf32> to vector<8x8xf32>
    %166 = vector.extract_strided_slice %164 {offsets = [8, 0], sizes = [8, 8], strides = [1, 1]} : vector<16x8xf32> to vector<8x8xf32>
    %167 = tpu.concatenate %144, %145, %165, %166 in 1 : vector<8x8xf32>, vector<8x8xf32>, vector<8x8xf32>, vector<8x8xf32> -> vector<8x32xf32>
    %c1_69 = arith.constant 1 : index
    %c0_70 = arith.constant 0 : index
    %c0_71 = arith.constant 0 : index
    %168 = vector.load %arg4[%c1_69, %c0_70, %c0_71] : memref<2x32x32xf32, #tpu.memory_space<vmem>>, vector<1x32x32xf32>
    %169 = vector.shape_cast %168 : vector<1x32x32xf32> to vector<32x32xf32>
    %cst_72 = arith.constant dense<0.000000e+00> : vector<8x32xf32>
    %170 = tpu.matmul %167, %169, %cst_72 {dimension_numbers = #tpu.dot_dimension_numbers<[1], [0], [0], [1], [0, 0, 1, 1], [], []>} : vector<8x32xf32>, vector<32x32xf32>, vector<8x32xf32> -> vector<8x32xf32>
    %171 = arith.addf %103, %170 : vector<8x32xf32>
    %c1_73 = arith.constant 1 : index
    %c0_74 = arith.constant 0 : index
    %c0_75 = arith.constant 0 : index
    %172 = vector.load %arg5[%c1_73, %c0_74, %c0_75] : memref<2x1x32xf32, #tpu.memory_space<vmem>>, vector<1x1x32xf32>
    %173 = vector.shape_cast %172 : vector<1x1x32xf32> to vector<1x32xf32>
    %174 = arith.mulf %171, %171 : vector<8x32xf32>
    %cst_76 = arith.constant dense<0.000000e+00> : vector<8xf32>
    %175 = vector.multi_reduction <add>, %174, %cst_76 [1] : vector<8x32xf32> to vector<8xf32>
    %176 = vector.shape_cast %175 : vector<8xf32> to vector<8x1xf32>
    %cst_77 = arith.constant 3.200000e+01 : f32
    %177 = vector.broadcast %cst_77 : f32 to vector<8x1xf32>
    %178 = arith.divf %176, %177 : vector<8x1xf32>
    %cst_78 = arith.constant 9.99999997E-7 : f32
    %179 = vector.broadcast %cst_78 : f32 to vector<8x1xf32>
    %180 = arith.addf %178, %179 : vector<8x1xf32>
    %181 = math.rsqrt %180 : vector<8x1xf32>
    %182 = vector.broadcast %181 : vector<8x1xf32> to vector<8x32xf32>
    %183 = arith.mulf %171, %182 : vector<8x32xf32>
    %184 = vector.broadcast %173 : vector<1x32xf32> to vector<8x32xf32>
    %185 = arith.mulf %183, %184 : vector<8x32xf32>
    %c1_79 = arith.constant 1 : index
    %c0_80 = arith.constant 0 : index
    %c0_81 = arith.constant 0 : index
    %186 = vector.load %arg6[%c1_79, %c0_80, %c0_81] : memref<2x32x128xf32, #tpu.memory_space<vmem>>, vector<1x32x128xf32>
    %187 = vector.shape_cast %186 : vector<1x32x128xf32> to vector<32x128xf32>
    %cst_82 = arith.constant dense<0.000000e+00> : vector<8x128xf32>
    %188 = tpu.matmul %185, %187, %cst_82 {dimension_numbers = #tpu.dot_dimension_numbers<[1], [0], [0], [1], [0, 0, 1, 1], [], []>} : vector<8x32xf32>, vector<32x128xf32>, vector<8x128xf32> -> vector<8x128xf32>
    %189 = vector.extract_strided_slice %188 {offsets = [0, 0], sizes = [8, 64], strides = [1, 1]} : vector<8x128xf32> to vector<8x64xf32>
    %190 = vector.extract_strided_slice %188 {offsets = [0, 64], sizes = [8, 64], strides = [1, 1]} : vector<8x128xf32> to vector<8x64xf32>
    %191 = arith.negf %189 : vector<8x64xf32>
    %192 = math.exp %191 : vector<8x64xf32>
    %cst_83 = arith.constant 1.000000e+00 : f32
    %193 = vector.broadcast %cst_83 : f32 to vector<8x64xf32>
    %194 = arith.addf %193, %192 : vector<8x64xf32>
    %195 = arith.divf %193, %194 : vector<8x64xf32>
    %196 = arith.mulf %189, %195 : vector<8x64xf32>
    %197 = arith.mulf %196, %190 : vector<8x64xf32>
    %c1_84 = arith.constant 1 : index
    %c0_85 = arith.constant 0 : index
    %c0_86 = arith.constant 0 : index
    %198 = vector.load %arg7[%c1_84, %c0_85, %c0_86] : memref<2x64x32xf32, #tpu.memory_space<vmem>>, vector<1x64x32xf32>
    %199 = vector.shape_cast %198 : vector<1x64x32xf32> to vector<64x32xf32>
    %cst_87 = arith.constant dense<0.000000e+00> : vector<8x32xf32>
    %200 = tpu.matmul %197, %199, %cst_87 {dimension_numbers = #tpu.dot_dimension_numbers<[1], [0], [0], [1], [0, 0, 1, 1], [], []>} : vector<8x64xf32>, vector<64x32xf32>, vector<8x32xf32> -> vector<8x32xf32>
    %201 = arith.addf %171, %200 : vector<8x32xf32>
    %c0_88 = arith.constant 0 : index
    %c0_89 = arith.constant 0 : index
    %202 = vector.load %arg12[%c0_88, %c0_89] : memref<1x32xf32, #tpu.memory_space<vmem>>, vector<1x32xf32>
    %203 = arith.mulf %201, %201 : vector<8x32xf32>
    %cst_90 = arith.constant dense<0.000000e+00> : vector<8xf32>
    %204 = vector.multi_reduction <add>, %203, %cst_90 [1] : vector<8x32xf32> to vector<8xf32>
    %205 = vector.shape_cast %204 : vector<8xf32> to vector<8x1xf32>
    %cst_91 = arith.constant 3.200000e+01 : f32
    %206 = vector.broadcast %cst_91 : f32 to vector<8x1xf32>
    %207 = arith.divf %205, %206 : vector<8x1xf32>
    %cst_92 = arith.constant 9.99999997E-7 : f32
    %208 = vector.broadcast %cst_92 : f32 to vector<8x1xf32>
    %209 = arith.addf %207, %208 : vector<8x1xf32>
    %210 = math.rsqrt %209 : vector<8x1xf32>
    %211 = vector.broadcast %210 : vector<8x1xf32> to vector<8x32xf32>
    %212 = arith.mulf %201, %211 : vector<8x32xf32>
    %213 = vector.broadcast %202 : vector<1x32xf32> to vector<8x32xf32>
    %214 = arith.mulf %212, %213 : vector<8x32xf32>
    %215 = tpu.concatenate %1, %103, %201, %214 in 1 : vector<8x32xf32>, vector<8x32xf32>, vector<8x32xf32>, vector<8x32xf32> -> vector<8x128xf32>
    %c0_93 = arith.constant 0 : index
    %c0_94 = arith.constant 0 : index
    %c0_95 = arith.constant 0 : index
    %216 = vector.load %arg13[%c0_93, %c0_94, %c0_95] : memref<1x8x128xf32, #tpu.memory_space<vmem>>, vector<1x8x128xf32>
    %217 = vector.shape_cast %216 : vector<1x8x128xf32> to vector<8x128xf32>
    %218 = vector.shape_cast %215 : vector<8x128xf32> to vector<1x8x128xf32>
    tpu.vector_store %arg13[%c0_93, %c0_94, %c0_95], %218 {strides = array<i32>} : memref<1x8x128xf32, #tpu.memory_space<vmem>>, vector<1x8x128xf32>,
    return
  }
  func.func @transform_0(%arg0: i32) -> (i32, i32, i32) {
    %c0_i32 = arith.constant 0 : i32
    %c0_i32_0 = arith.constant 0 : i32
    %c0_i32_1 = arith.constant 0 : i32
    return %arg0, %c0_i32, %c0_i32_0 : i32, i32, i32
  }
  func.func @transform_1(%arg0: i32) -> (i32, i32, i32) {
    %c0_i32 = arith.constant 0 : i32
    %c0_i32_0 = arith.constant 0 : i32
    %c0_i32_1 = arith.constant 0 : i32
    %c0_i32_2 = arith.constant 0 : i32
    return %c0_i32, %c0_i32_0, %c0_i32_1 : i32, i32, i32
  }
  func.func @transform_2(%arg0: i32) -> (i32, i32, i32) {
    %c0_i32 = arith.constant 0 : i32
    %c0_i32_0 = arith.constant 0 : i32
    %c0_i32_1 = arith.constant 0 : i32
    %c0_i32_2 = arith.constant 0 : i32
    return %c0_i32, %c0_i32_0, %c0_i32_1 : i32, i32, i32
  }
  func.func @transform_3(%arg0: i32) -> (i32, i32, i32) {
    %c0_i32 = arith.constant 0 : i32
    %c0_i32_0 = arith.constant 0 : i32
    %c0_i32_1 = arith.constant 0 : i32
    %c0_i32_2 = arith.constant 0 : i32
    return %c0_i32, %c0_i32_0, %c0_i32_1 : i32, i32, i32
  }
  func.func @transform_4(%arg0: i32) -> (i32, i32, i32) {
    %c0_i32 = arith.constant 0 : i32
    %c0_i32_0 = arith.constant 0 : i32
    %c0_i32_1 = arith.constant 0 : i32
    %c0_i32_2 = arith.constant 0 : i32
    return %c0_i32, %c0_i32_0, %c0_i32_1 : i32, i32, i32
  }
  func.func @transform_5(%arg0: i32) -> (i32, i32, i32) {
    %c0_i32 = arith.constant 0 : i32
    %c0_i32_0 = arith.constant 0 : i32
    %c0_i32_1 = arith.constant 0 : i32
    %c0_i32_2 = arith.constant 0 : i32
    return %c0_i32, %c0_i32_0, %c0_i32_1 : i32, i32, i32
  }
  func.func @transform_6(%arg0: i32) -> (i32, i32, i32) {
    %c0_i32 = arith.constant 0 : i32
    %c0_i32_0 = arith.constant 0 : i32
    %c0_i32_1 = arith.constant 0 : i32
    %c0_i32_2 = arith.constant 0 : i32
    return %c0_i32, %c0_i32_0, %c0_i32_1 : i32, i32, i32
  }
  func.func @transform_7(%arg0: i32) -> (i32, i32) {
    %c0_i32 = arith.constant 0 : i32
    %c0_i32_0 = arith.constant 0 : i32
    %c0_i32_1 = arith.constant 0 : i32
    return %c0_i32, %c0_i32_0 : i32, i32
  }
  func.func @transform_8(%arg0: i32) -> (i32, i32) {
    %c0_i32 = arith.constant 0 : i32
    %c0_i32_0 = arith.constant 0 : i32
    %c0_i32_1 = arith.constant 0 : i32
    return %c0_i32, %c0_i32_0 : i32, i32
  }
  func.func @transform_9(%arg0: i32) -> (i32, i32) {
    %c0_i32 = arith.constant 0 : i32
    %c0_i32_0 = arith.constant 0 : i32
    %c0_i32_1 = arith.constant 0 : i32
    return %c0_i32, %c0_i32_0 : i32, i32
  }
  func.func @transform_10(%arg0: i32) -> (i32, i32) {
    %c0_i32 = arith.constant 0 : i32
    %c0_i32_0 = arith.constant 0 : i32
    %c0_i32_1 = arith.constant 0 : i32
    return %c0_i32, %c0_i32_0 : i32, i32
  }
  func.func @transform_11(%arg0: i32) -> (i32, i32) {
    %c0_i32 = arith.constant 0 : i32
    %c0_i32_0 = arith.constant 0 : i32
    %c0_i32_1 = arith.constant 0 : i32
    return %c0_i32, %c0_i32_0 : i32, i32
  }
  func.func @transform_12(%arg0: i32) -> (i32, i32, i32) {
    %c0_i32 = arith.constant 0 : i32
    %c0_i32_0 = arith.constant 0 : i32
    %c0_i32_1 = arith.constant 0 : i32
    return %arg0, %c0_i32, %c0_i32_0 : i32, i32, i32
  }
}

</mosaic_0001>

<llo_original>
// kernel: tpu_custom_call.1
$region0: #{tpu_custom_call.1}
  #allocation0 [shape = 'u32[]', space=smem, size = 0x4, offset = 0x4, fixed_abs, tag = 'smem constant byte address 0x4 - core index']
  #allocation1 [shape = 'u32[144,128]{1,0:T(1,128)}', space=vmem, size = 0x12000, scoped, tag = 'internal scratch']
  %s0 = inlined_call_operand.vmem [shape: f32[2,8,32], index: 0, kind: input, shape index: {}]
  %s1 = inlined_call_operand.vmem [shape: f32[2,1,32], index: 1, kind: input, shape index: {}]
  %s2 = inlined_call_operand.vmem [shape: f32[2,32,64], index: 2, kind: input, shape index: {}]
  %s3 = inlined_call_operand.vmem [shape: f32[2,32,32], index: 3, kind: input, shape index: {}]
  %s4 = inlined_call_operand.hbm [shape: f32[2,1,32], index: 4, kind: input, shape index: {}]
  %s5 = inlined_call_operand.vmem [shape: f32[2,32,128], index: 5, kind: input, shape index: {}]
  %s6 = inlined_call_operand.vmem [shape: f32[2,64,32], index: 6, kind: input, shape index: {}]
  %s7 = inlined_call_operand.vmem [shape: f32[8,64], index: 7, kind: input, shape index: {}]
  %s8 = inlined_call_operand.vmem [shape: f32[8,64], index: 8, kind: input, shape index: {}]
  %s9 = inlined_call_operand.hbm [shape: f32[64,64], index: 9, kind: input, shape index: {}]
  %s10 = inlined_call_operand.vmem [shape: f32[16,8], index: 10, kind: input, shape index: {}]
  %s11 = inlined_call_operand.vmem [shape: f32[1,32], index: 11, kind: input, shape index: {}]
  %s12 = inlined_call_operand.hbm [shape: f32[2,8,128], index: 12, kind: output, shape index: {}]
  %s13 = sld [smem:[#allocation0]]
  $region89: #{tpu_custom_call.1} parent=0
    _
  %s15 = ssub.s32 1, %s13
  %s16 = scalar_select 0, %s15, %s13
  $region1: #{tpu_custom_call.1} parent=0
    #allocation2 [shape = 'u8[1024]{0}', space=vmem, size = 0x400, scoped, tag = 'input window, operand 4, single buffered']
    #allocation3 [shape = 's32[2]{0}', space=sflag, size = 0x8, scoped, tag = 'scoped memory for tpu_custom_call.1']
    #allocation4 [shape = 's32[2]{0}', space=sflag, size = 0x8, scoped, tag = 'scoped memory for tpu_custom_call.1']
    #allocation5 [shape = 'u8[32768]{0}', space=vmem, size = 0x8000, scoped, tag = 'input window, operand 9, single buffered']
    #allocation6 [shape = 's32[1]{0}', space=sflag, size = 0x4, scoped, tag = 'scoped memory for tpu_custom_call.1']
    #allocation7 [shape = 'u8[8192]{0}', space=vmem, size = 0x2000, scoped, tag = 'output window, operand 0']
    %17 = vsyncpa [#allocation3], 0
    %18 = vsyncpa [#allocation6], 0
    %19 = vsyncpa [#allocation4], 0
    %s20 = scalar_lea.sflag [#allocation4], 1
    %21 = vsyncpa %s20, 0
    loop: start=0, step=1, limit=4
    $region2: #{tpu_custom_call.1} parent=1 // loop_pre_header
      _
    $region3: #{tpu_custom_call.1} parent=1 // loop_header
      %s23 = sphi 0, %s27
      %p24 = scmp.ge.s32.totalorder %s23, 4
      %s33 = sphi 0, %s35
      %s36 = sphi 0, %s33
      %s37 = sphi 0, %s36
      %s53 = sphi 0, %s37
      %s57 = sphi 0, %s57
      %s59 = sphi 0, %s57
      %s60 = sphi 0, %s59
      %s74 = sphi 0, %s60
      %s78 = sphi 0, %s78
      %s80 = sphi 0, %s78
      %s81 = sphi 0, %s80
      %s95 = sphi 0, %s81
      %s99 = sphi 0, %s99
      %s101 = sphi 0, %s99
      %s102 = sphi 0, %s101
      %s116 = sphi 0, %s102
      %s120 = sphi 0, %s120
      %s122 = sphi 0, %s120
      %s123 = sphi 0, %s122
      %s137 = sphi 0, %s123
      %s141 = sphi 0, %s141
      %s143 = sphi 0, %s141
      %s144 = sphi 0, %s143
      %s158 = sphi 0, %s144
      %s162 = sphi 0, %s162
      %s164 = sphi 0, %s162
      %s165 = sphi 0, %s164
      %s179 = sphi 0, %s165
      %s183 = sphi 0, %s183
      %s185 = sphi 0, %s183
      %s186 = sphi 0, %s185
      %s200 = sphi 0, %s186
      %s204 = sphi 0, %s204
      %s206 = sphi 0, %s204
      %s207 = sphi 0, %s206
      %s221 = sphi 0, %s207
      %s225 = sphi 0, %s225
      %s227 = sphi 0, %s225
      %s228 = sphi 0, %s227
      %s242 = sphi 0, %s228
      %s246 = sphi 0, %s246
      %s248 = sphi 0, %s246
      %s249 = sphi 0, %s248
      %s263 = sphi 0, %s249
      %s267 = sphi 0, %s267
      %s269 = sphi 0, %s267
      %s270 = sphi 0, %s269
      %s284 = sphi 0, %s270
      %s290 = sphi 0, %s292
      %s293 = sphi 0, %s290
      %s294 = sphi 0, %s293
      %s310 = sphi 0, %s294
    $region4: #{tpu_custom_call.1} parent=1 // loop_header_branch
      %26 = sbr.rel (%p24) target = $region8
    $region5: #{tpu_custom_call.1} parent=1 // loop_body
      %s28 = ssub.s32 %s23, 1
      %s29 = ssub.s32 %s23, 2
      %s30 = sadd.s32 %s23, 1
      %s31 = ssub.s32 %s23, %s30
      %p32 = scmp.eq.s32.totalorder %s31, 0
      %s34 = sadd.s32 %s33, 1
      %s35 = scalar_select %p32, %s33, %s34
      %p38 = pneg %p32
      %p39 = scmp.eq.s32.totalorder %s23, 1
      %p40 = por %p38, %p39
      %p41 = scmp.ne.s32.totalorder %s33, %s36
      %p42 = scmp.eq.s32.totalorder %s23, 0
      %p43 = por %p41, %p42
      %p44 = scmp.ne.s32.totalorder %s33, %s36
      %p45 = scmp.eq.s32.totalorder %s28, 1
      %p46 = por %p44, %p45
      %p47 = scmp.ne.s32.totalorder %s36, %s37
      %p48 = scmp.eq.s32.totalorder %s28, 0
      %p49 = por %p47, %p48
      %p50 = scmp.ne.s32.totalorder %s36, %s37
      %p51 = scmp.eq.s32.totalorder %s29, 1
      %p52 = por %p50, %p51
      %p54 = scmp.ne.s32.totalorder %s37, %s53
      %p55 = scmp.eq.s32.totalorder %s29, 0
      %p56 = por %p54, %p55
      %s58 = sadd.s32 %s57, 1
      %p61 = scmp.eq.s32.totalorder %s23, 1
      %p62 = scmp.ne.s32.totalorder %s57, %s59
      %p63 = scmp.eq.s32.totalorder %s23, 0
      %p64 = por %p62, %p63
      %p65 = scmp.ne.s32.totalorder %s57, %s59
      %p66 = scmp.eq.s32.totalorder %s28, 1
      %p67 = por %p65, %p66
      %p68 = scmp.ne.s32.totalorder %s59, %s60
      %p69 = scmp.eq.s32.totalorder %s28, 0
      %p70 = por %p68, %p69
      %p71 = scmp.ne.s32.totalorder %s59, %s60
      %p72 = scmp.eq.s32.totalorder %s29, 1
      %p73 = por %p71, %p72
      %p75 = scmp.ne.s32.totalorder %s60, %s74
      %p76 = scmp.eq.s32.totalorder %s29, 0
      %p77 = por %p75, %p76
      %s79 = sadd.s32 %s78, 1
      %p82 = scmp.eq.s32.totalorder %s23, 1
      %p83 = scmp.ne.s32.totalorder %s78, %s80
      %p84 = scmp.eq.s32.totalorder %s23, 0
      %p85 = por %p83, %p84
      %p86 = scmp.ne.s32.totalorder %s78, %s80
      %p87 = scmp.eq.s32.totalorder %s28, 1
      %p88 = por %p86, %p87
      %p89 = scmp.ne.s32.totalorder %s80, %s81
      %p90 = scmp.eq.s32.totalorder %s28, 0
      %p91 = por %p89, %p90
      %p92 = scmp.ne.s32.totalorder %s80, %s81
      %p93 = scmp.eq.s32.totalorder %s29, 1
      %p94 = por %p92, %p93
      %p96 = scmp.ne.s32.totalorder %s81, %s95
      %p97 = scmp.eq.s32.totalorder %s29, 0
      %p98 = por %p96, %p97
      %s100 = sadd.s32 %s99, 1
      %p103 = scmp.eq.s32.totalorder %s23, 1
      %p104 = scmp.ne.s32.totalorder %s99, %s101
      %p105 = scmp.eq.s32.totalorder %s23, 0
      %p106 = por %p104, %p105
      %p107 = scmp.ne.s32.totalorder %s99, %s101
      %p108 = scmp.eq.s32.totalorder %s28, 1
      %p109 = por %p107, %p108
      %p110 = scmp.ne.s32.totalorder %s101, %s102
      %p111 = scmp.eq.s32.totalorder %s28, 0
      %p112 = por %p110, %p111
      %p113 = scmp.ne.s32.totalorder %s101, %s102
      %p114 = scmp.eq.s32.totalorder %s29, 1
      %p115 = por %p113, %p114
      %p117 = scmp.ne.s32.totalorder %s102, %s116
      %p118 = scmp.eq.s32.totalorder %s29, 0
      %p119 = por %p117, %p118
      %s121 = sadd.s32 %s120, 1
      %p124 = scmp.eq.s32.totalorder %s23, 1
      %p125 = scmp.ne.s32.totalorder %s120, %s122
      %p126 = scmp.eq.s32.totalorder %s23, 0
      %p127 = por %p125, %p126
      %p128 = scmp.ne.s32.totalorder %s120, %s122
      %p129 = scmp.eq.s32.totalorder %s28, 1
      %p130 = por %p128, %p129
      %p131 = scmp.ne.s32.totalorder %s122, %s123
      %p132 = scmp.eq.s32.totalorder %s28, 0
      %p133 = por %p131, %p132
      %p134 = scmp.ne.s32.totalorder %s122, %s123
      %p135 = scmp.eq.s32.totalorder %s29, 1
      %p136 = por %p134, %p135
      %p138 = scmp.ne.s32.totalorder %s123, %s137
      %p139 = scmp.eq.s32.totalorder %s29, 0
      %p140 = por %p138, %p139
      %s142 = sadd.s32 %s141, 1
      %p145 = scmp.eq.s32.totalorder %s23, 1
      %p146 = scmp.ne.s32.totalorder %s141, %s143
      %p147 = scmp.eq.s32.totalorder %s23, 0
      %p148 = por %p146, %p147
      %p149 = scmp.ne.s32.totalorder %s141, %s143
      %p150 = scmp.eq.s32.totalorder %s28, 1
      %p151 = por %p149, %p150
      %p152 = scmp.ne.s32.totalorder %s143, %s144
      %p153 = scmp.eq.s32.totalorder %s28, 0
      %p154 = por %p152, %p153
      %p155 = scmp.ne.s32.totalorder %s143, %s144
      %p156 = scmp.eq.s32.totalorder %s29, 1
      %p157 = por %p155, %p156
      %p159 = scmp.ne.s32.totalorder %s144, %s158
      %p160 = scmp.eq.s32.totalorder %s29, 0
      %p161 = por %p159, %p160
      %s163 = sadd.s32 %s162, 1
      %p166 = scmp.eq.s32.totalorder %s23, 1
      %p167 = scmp.ne.s32.totalorder %s162, %s164
      %p168 = scmp.eq.s32.totalorder %s23, 0
      %p169 = por %p167, %p168
      %p170 = scmp.ne.s32.totalorder %s162, %s164
      %p171 = scmp.eq.s32.totalorder %s28, 1
      %p172 = por %p170, %p171
      %p173 = scmp.ne.s32.totalorder %s164, %s165
      %p174 = scmp.eq.s32.totalorder %s28, 0
      %p175 = por %p173, %p174
      %p176 = scmp.ne.s32.totalorder %s164, %s165
      %p177 = scmp.eq.s32.totalorder %s29, 1
      %p178 = por %p176, %p177
      %p180 = scmp.ne.s32.totalorder %s165, %s179
      %p181 = scmp.eq.s32.totalorder %s29, 0
      %p182 = por %p180, %p181
      %s184 = sadd.s32 %s183, 1
      %p187 = scmp.eq.s32.totalorder %s23, 1
      %p188 = scmp.ne.s32.totalorder %s183, %s185
      %p189 = scmp.eq.s32.totalorder %s23, 0
      %p190 = por %p188, %p189
      %p191 = scmp.ne.s32.totalorder %s183, %s185
      %p192 = scmp.eq.s32.totalorder %s28, 1
      %p193 = por %p191, %p192
      %p194 = scmp.ne.s32.totalorder %s185, %s186
      %p195 = scmp.eq.s32.totalorder %s28, 0
      %p196 = por %p194, %p195
      %p197 = scmp.ne.s32.totalorder %s185, %s186
      %p198 = scmp.eq.s32.totalorder %s29, 1
      %p199 = por %p197, %p198
      %p201 = scmp.ne.s32.totalorder %s186, %s200
      %p202 = scmp.eq.s32.totalorder %s29, 0
      %p203 = por %p201, %p202
      %s205 = sadd.s32 %s204, 1
      %p208 = scmp.eq.s32.totalorder %s23, 1
      %p209 = scmp.ne.s32.totalorder %s204, %s206
      %p210 = scmp.eq.s32.totalorder %s23, 0
      %p211 = por %p209, %p210
      %p212 = scmp.ne.s32.totalorder %s204, %s206
      %p213 = scmp.eq.s32.totalorder %s28, 1
      %p214 = por %p212, %p213
      %p215 = scmp.ne.s32.totalorder %s206, %s207
      %p216 = scmp.eq.s32.totalorder %s28, 0
      %p217 = por %p215, %p216
      %p218 = scmp.ne.s32.totalorder %s206, %s207
      %p219 = scmp.eq.s32.totalorder %s29, 1
      %p220 = por %p218, %p219
      %p222 = scmp.ne.s32.totalorder %s207, %s221
      %p223 = scmp.eq.s32.totalorder %s29, 0
      %p224 = por %p222, %p223
      %s226 = sadd.s32 %s225, 1
      %p229 = scmp.eq.s32.totalorder %s23, 1
      %p230 = scmp.ne.s32.totalorder %s225, %s227
      %p231 = scmp.eq.s32.totalorder %s23, 0
      %p232 = por %p230, %p231
      %p233 = scmp.ne.s32.totalorder %s225, %s227
      %p234 = scmp.eq.s32.totalorder %s28, 1
      %p235 = por %p233, %p234
      %p236 = scmp.ne.s32.totalorder %s227, %s228
      %p237 = scmp.eq.s32.totalorder %s28, 0
      %p238 = por %p236, %p237
      %p239 = scmp.ne.s32.totalorder %s227, %s228
      %p240 = scmp.eq.s32.totalorder %s29, 1
      %p241 = por %p239, %p240
      %p243 = scmp.ne.s32.totalorder %s228, %s242
      %p244 = scmp.eq.s32.totalorder %s29, 0
      %p245 = por %p243, %p244
      %s247 = sadd.s32 %s246, 1
      %p250 = scmp.eq.s32.totalorder %s23, 1
      %p251 = scmp.ne.s32.totalorder %s246, %s248
      %p252 = scmp.eq.s32.totalorder %s23, 0
      %p253 = por %p251, %p252
      %p254 = scmp.ne.s32.totalorder %s246, %s248
      %p255 = scmp.eq.s32.totalorder %s28, 1
      %p256 = por %p254, %p255
      %p257 = scmp.ne.s32.totalorder %s248, %s249
      %p258 = scmp.eq.s32.totalorder %s28, 0
      %p259 = por %p257, %p258
      %p260 = scmp.ne.s32.totalorder %s248, %s249
      %p261 = scmp.eq.s32.totalorder %s29, 1
      %p262 = por %p260, %p261
      %p264 = scmp.ne.s32.totalorder %s249, %s263
      %p265 = scmp.eq.s32.totalorder %s29, 0
      %p266 = por %p264, %p265
      %s268 = sadd.s32 %s267, 1
      %p271 = scmp.eq.s32.totalorder %s23, 1
      %p272 = scmp.ne.s32.totalorder %s267, %s269
      %p273 = scmp.eq.s32.totalorder %s23, 0
      %p274 = por %p272, %p273
      %p275 = scmp.ne.s32.totalorder %s267, %s269
      %p276 = scmp.eq.s32.totalorder %s28, 1
      %p277 = por %p275, %p276
      %p278 = scmp.ne.s32.totalorder %s269, %s270
      %p279 = scmp.eq.s32.totalorder %s28, 0
      %p280 = por %p278, %p279
      %p281 = scmp.ne.s32.totalorder %s269, %s270
      %p282 = scmp.eq.s32.totalorder %s29, 1
      %p283 = por %p281, %p282
      %p285 = scmp.ne.s32.totalorder %s270, %s284
      %p286 = scmp.eq.s32.totalorder %s29, 0
      %p287 = por %p285, %p286
      %s288 = ssub.s32 %s23, %s30
      %p289 = scmp.eq.s32.totalorder %s288, 0
      %s291 = sadd.s32 %s290, 1
      %s292 = scalar_select %p289, %s290, %s291
      %p295 = pneg %p289
      %p296 = scmp.eq.s32.totalorder %s23, 1
      %p297 = por %p295, %p296
      %p298 = scmp.ne.s32.totalorder %s290, %s293
      %p299 = scmp.eq.s32.totalorder %s23, 0
      %p300 = por %p298, %p299
      %p301 = scmp.ne.s32.totalorder %s290, %s293
      %p302 = scmp.eq.s32.totalorder %s28, 1
      %p303 = por %p301, %p302
      %p304 = scmp.ne.s32.totalorder %s293, %s294
      %p305 = scmp.eq.s32.totalorder %s28, 0
      %p306 = por %p304, %p305
      %p307 = scmp.ne.s32.totalorder %s293, %s294
      %p308 = scmp.eq.s32.totalorder %s29, 1
      %p309 = por %p307, %p308
      %p311 = scmp.ne.s32.totalorder %s294, %s310
      %p312 = scmp.eq.s32.totalorder %s29, 0
      %p313 = por %p311, %p312
      %p314 = scmp.le.s32.totalorder 1, %s23
      %p315 = scmp.lt.s32.totalorder %s23, 3
      %p316 = pnand %p314, %p315
      %p317 = pneg %p316
      // Predicated region
      $region9: #{tpu_custom_call.1} parent=5 // pred_check
        _
      $region10: #{tpu_custom_call.1} parent=5 // pred_check_branch
        %319 = sbr.rel (%p316) target = $region12
      $region11: #{tpu_custom_call.1} parent=5 // pred_region
        %s320 = ssub.s32 %s23, 1
        // Predicated region
        $region13: #{tpu_custom_call.1} parent=11 // pred_check
          %p321 = pneg %p70
        $region14: #{tpu_custom_call.1} parent=11 // pred_check_branch
          %323 = sbr.rel (%p321) target = $region16
        $region15: #{tpu_custom_call.1} parent=11 // pred_region
          _
        $region16: #{tpu_custom_call.1} parent=11 // pred_fallthru
          _
        // Predicated region
        $region17: #{tpu_custom_call.1} parent=11 // pred_check
          %p324 = pneg %p91
        $region18: #{tpu_custom_call.1} parent=11 // pred_check_branch
          %326 = sbr.rel (%p324) target = $region20
        $region19: #{tpu_custom_call.1} parent=11 // pred_region
          _
        $region20: #{tpu_custom_call.1} parent=11 // pred_fallthru
          _
        // Predicated region
        $region21: #{tpu_custom_call.1} parent=11 // pred_check
          %p327 = pneg %p112
        $region22: #{tpu_custom_call.1} parent=11 // pred_check_branch
          %329 = sbr.rel (%p327) target = $region24
        $region23: #{tpu_custom_call.1} parent=11 // pred_region
          _
        $region24: #{tpu_custom_call.1} parent=11 // pred_fallthru
          _
        // Predicated region
        $region25: #{tpu_custom_call.1} parent=11 // pred_check
          %p330 = pneg %p133
        $region26: #{tpu_custom_call.1} parent=11 // pred_check_branch
          %332 = sbr.rel (%p330) target = $region28
        $region27: #{tpu_custom_call.1} parent=11 // pred_region
          %s334 = ssub.s32 32, 32
          %335 = vsyncadd [#allocation3], %s334
          %s336 = sshll.u32 [#allocation2], 4
          %s337 = int_to_ptr.vmem [resolvable:$true] %s336
          %342 = dma.hbm_to_vmem [thread:$0]  %s4, 32, %s337, [#allocation3], 16, 16, 1
        $region28: #{tpu_custom_call.1} parent=11 // pred_fallthru
          _
        // Predicated region
        $region29: #{tpu_custom_call.1} parent=11 // pred_check
          %p343 = pneg %p154
        $region30: #{tpu_custom_call.1} parent=11 // pred_check_branch
          %345 = sbr.rel (%p343) target = $region32
        $region31: #{tpu_custom_call.1} parent=11 // pred_region
          _
        $region32: #{tpu_custom_call.1} parent=11 // pred_fallthru
          _
        // Predicated region
        $region33: #{tpu_custom_call.1} parent=11 // pred_check
          %p346 = pneg %p175
        $region34: #{tpu_custom_call.1} parent=11 // pred_check_branch
          %348 = sbr.rel (%p346) target = $region36
        $region35: #{tpu_custom_call.1} parent=11 // pred_region
          _
        $region36: #{tpu_custom_call.1} parent=11 // pred_fallthru
          _
        // Predicated region
        $region37: #{tpu_custom_call.1} parent=11 // pred_check
          %p349 = pneg %p196
        $region38: #{tpu_custom_call.1} parent=11 // pred_check_branch
          %351 = sbr.rel (%p349) target = $region40
        $region39: #{tpu_custom_call.1} parent=11 // pred_region
          _
        $region40: #{tpu_custom_call.1} parent=11 // pred_fallthru
          _
        // Predicated region
        $region41: #{tpu_custom_call.1} parent=11 // pred_check
          %p352 = pneg %p217
        $region42: #{tpu_custom_call.1} parent=11 // pred_check_branch
          %354 = sbr.rel (%p352) target = $region44
        $region43: #{tpu_custom_call.1} parent=11 // pred_region
          _
        $region44: #{tpu_custom_call.1} parent=11 // pred_fallthru
          _
        // Predicated region
        $region45: #{tpu_custom_call.1} parent=11 // pred_check
          %p355 = pneg %p238
        $region46: #{tpu_custom_call.1} parent=11 // pred_check_branch
          %357 = sbr.rel (%p355) target = $region48
        $region47: #{tpu_custom_call.1} parent=11 // pred_region
          %s359 = ssub.s32 1024, 1024
          %360 = vsyncadd [#allocation6], %s359
          %s361 = sshll.u32 [#allocation5], 4
          %s362 = int_to_ptr.vmem [resolvable:$true] %s361
          %367 = dma.hbm_to_vmem [thread:$0]  %s9, 1024, %s362, [#allocation6], 128, 128, 8
        $region48: #{tpu_custom_call.1} parent=11 // pred_fallthru
          _
        // Predicated region
        $region49: #{tpu_custom_call.1} parent=11 // pred_check
          %p368 = pneg %p259
        $region50: #{tpu_custom_call.1} parent=11 // pred_check_branch
          %370 = sbr.rel (%p368) target = $region52
        $region51: #{tpu_custom_call.1} parent=11 // pred_region
          _
        $region52: #{tpu_custom_call.1} parent=11 // pred_fallthru
          _
        // Predicated region
        $region53: #{tpu_custom_call.1} parent=11 // pred_check
          %p371 = pneg %p280
        $region54: #{tpu_custom_call.1} parent=11 // pred_check_branch
          %373 = sbr.rel (%p371) target = $region56
        $region55: #{tpu_custom_call.1} parent=11 // pred_region
          _
        $region56: #{tpu_custom_call.1} parent=11 // pred_fallthru
          _
      $region12: #{tpu_custom_call.1} parent=5 // pred_fallthru
        _
      %p374 = scmp.lt.s32.totalorder %s23, 2
      // Predicated region
      $region57: #{tpu_custom_call.1} parent=5 // pred_check
        %p375 = pneg %p374
      $region58: #{tpu_custom_call.1} parent=5 // pred_check_branch
        %377 = sbr.rel (%p375) target = $region60
      $region59: #{tpu_custom_call.1} parent=5 // pred_region
        // Predicated region
        $region61: #{tpu_custom_call.1} parent=59 // pred_check
          %p378 = pneg %p43
        $region62: #{tpu_custom_call.1} parent=59 // pred_check_branch
          %380 = sbr.rel (%p378) target = $region64
        $region63: #{tpu_custom_call.1} parent=59 // pred_region
          %p381 = scmp.lt.s32.totalorder %s23, 1
          %s382 = scalar_select %p381, %s23, 1
          %s383 = smul.addr %s382, 8
          %s384 = scalar_lea.vmem %s0, %s383
        $region64: #{tpu_custom_call.1} parent=59 // pred_fallthru
          _
      $region60: #{tpu_custom_call.1} parent=5 // pred_fallthru
        _
      %p385 = scmp.le.s32.totalorder 1, %s23
      %p386 = scmp.lt.s32.totalorder %s23, 3
      %p387 = pnand %p385, %p386
      %p388 = pneg %p387
      // Predicated region
      $region65: #{tpu_custom_call.1} parent=5 // pred_check
        _
      $region66: #{tpu_custom_call.1} parent=5 // pred_check_branch
        %390 = sbr.rel (%p387) target = $region68
      $region67: #{tpu_custom_call.1} parent=5 // pred_region
        %s391 = ssub.s32 %s23, 1
        // Predicated region
        $region69: #{tpu_custom_call.1} parent=67 // pred_check
          %p392 = pneg %p133
        $region70: #{tpu_custom_call.1} parent=67 // pred_check_branch
          %394 = sbr.rel (%p392) target = $region72
        $region71: #{tpu_custom_call.1} parent=67 // pred_region
          %395 = dma.done [#allocation3], 32
        $region72: #{tpu_custom_call.1} parent=67 // pred_fallthru
          _
        // Predicated region
        $region73: #{tpu_custom_call.1} parent=67 // pred_check
          %p396 = pneg %p238
        $region74: #{tpu_custom_call.1} parent=67 // pred_check_branch
          %398 = sbr.rel (%p396) target = $region76
        $region75: #{tpu_custom_call.1} parent=67 // pred_region
          %399 = dma.done [#allocation6], 1024
        $region76: #{tpu_custom_call.1} parent=67 // pred_fallthru
          _
        %p400 = scmp.lt.s32.totalorder %s28, 1
        %s401 = scalar_select %p400, %s28, 1
        %s402 = smul.addr %s401, 8
        %s403 = scalar_lea.vmem %s0, %s402
        %p404 = pneg %p49
        %p405 = pneg %p46
        %p406 = pneg %p70
        %p407 = pneg %p67
        %p408 = pneg %p91
        %p409 = pneg %p88
        %p410 = pneg %p112
        %p411 = pneg %p109
        %p412 = pneg %p133
        %p413 = pneg %p130
        %p414 = pneg %p154
        %p415 = pneg %p151
        %p416 = pneg %p175
        %p417 = pneg %p172
        %p418 = pneg %p196
        %p419 = pneg %p193
        %p420 = pneg %p217
        %p421 = pneg %p214
        %p422 = pneg %p238
        %p423 = pneg %p235
        %p424 = pneg %p259
        %p425 = pneg %p256
        %p426 = pneg %p280
        %p427 = pneg %p277
        %p428 = pneg %p306
        %p429 = pneg %p303
        %s430 = sand.u32 %s293, 1
        %s431 = scalar_lea.sflag [#allocation4], %s430
        %s432 = sand.u32 %s293, 1
        %s433 = smul.addr %s432, 8
        %s434 = scalar_lea.vmem [#allocation7], %s433
        %p435 = scmp.lt.s32.totalorder %s28, 1
        %s436 = scalar_select %p435, %s28, 1
        %s437 = smul.addr %s436, 8
        %s438 = scalar_lea.vmem %s0, %s437
        %v439 = vld [vmem:[%s438] sm:$0xff]
        %v440 = vld [vmem:[%s7] sm:$0xff]
        %v441 = vld [vmem:[%s8] sm:$0xff]
        %v442 = vld [vmem:[#allocation5] sm:$0xff]
        %v443 = vld [vmem:[#allocation5 + $0x8] sm:$0xff]
        %v444 = vld [vmem:[#allocation5 + $0x10] sm:$0xff]
        %v445 = vld [vmem:[#allocation5 + $0x18] sm:$0xff]
        %v446 = vld [vmem:[#allocation5 + $0x20] sm:$0xff]
        %v447 = vld [vmem:[#allocation5 + $0x28] sm:$0xff]
        %v448 = vld [vmem:[#allocation5 + $0x30] sm:$0xff]
        %v449 = vld [vmem:[#allocation5 + $0x38] sm:$0xff]
        %v450 = vld [vmem:[%s10] sm:$0xff]
        %v451 = vld [vmem:[%s10 + $0x8] sm:$0xff]
        %v452 = vld [vmem:[%s1] sm:$0x1]
        %v453 = vmul.f32 %v439, %v439
        %vm454 = vcmask 261120
        %v455 = vsel %vm454, %v453, 0.0
        %456 = vadd.xlane.f32.xlu0 %v455
        %v457 = vpop.xlane.xlu0 %456
        %v458 = vrcp.pop 32.0
        %v459 = vmul.f32 %v457, %v458
        %v460 = vadd.f32 %v459, 1e-06
        %v461 = vrsqrt.pop %v460
        %v462 = vmul.f32 %v439, %v461
        %v464 = vlaneseq
        %v465 = vshrl.u32 %v464, 7
        %v466 = vsub.s32 0, %v465
        %v467 = vrot.slane %v452, %v466
        %v469 = vmul.f32 %v462, %v467
        %v470 = vld [vmem:[%s2] sm:$0xff]
        %v471 = vld [vmem:[%s2 + $0x8] sm:$0xff]
        %v472 = vld [vmem:[%s2 + $0x10] sm:$0xff]
        %v473 = vld [vmem:[%s2 + $0x18] sm:$0xff]
        %v475 = vsel %vm454, %v469, 0
        %477 = vmatprep.subr.mxu0 0.0
        %478 = vmatpush1.msra.mxu0 %v470
        %479 = vmatprep.subr.mxu0 0.0
        %480 = vmatpush1.msra.mxu0 %v471
        %481 = vmatprep.subr.mxu0 0.0
        %482 = vmatpush1.msra.mxu0 %v472
        %483 = vmatprep.subr.mxu0 0.0
        %484 = vmatpush1.msra.mxu0 %v473
        %485 = vmatprep.subr.mxu0 0.0
        %486 = vmatpush1.msra.mxu0 0.0
        %487 = vmatprep.subr.mxu0 0.0
        %488 = vmatpush1.msra.mxu0 0.0
        %489 = vmatprep.subr.mxu0 0.0
        %490 = vmatpush1.msra.mxu0 0.0
        %491 = vmatprep.subr.mxu0 0.0
        %492 = vmatpush1.msra.mxu0 0.0
        %493 = vmatprep.subr.mxu0 0.0
        %494 = vmatpush1.msra.mxu0 0.0
        %495 = vmatprep.subr.mxu0 0.0
        %496 = vmatpush1.msra.mxu0 0.0
        %497 = vmatprep.subr.mxu0 0.0
        %498 = vmatpush1.msra.mxu0 0.0
        %499 = vmatprep.subr.mxu0 0.0
        %500 = vmatpush1.msra.mxu0 0.0
        %501 = vmatprep.subr.mxu0 0.0
        %502 = vmatpush1.msra.mxu0 0.0
        %503 = vmatprep.subr.mxu0 0.0
        %504 = vmatpush1.msra.mxu0 0.0
        %505 = vmatprep.subr.mxu0 0.0
        %506 = vmatpush1.msra.mxu0 0.0
        %507 = vmatprep.subr.mxu0 0.0
        %508 = vmatpush1.msra.mxu0 0.0
        %509 = vmatprep.subr.mxu0 0.0
        %510 = vmatpush1.msra.mxu0 0.0
        %511 = vmatprep.subr.mxu0 0.0
        %512 = vmatpush1.msra.mxu0 0.0
        %513 = vmatprep.subr.mxu0 0.0
        %514 = vmatpush1.msra.mxu0 0.0
        %515 = vmatprep.subr.mxu0 0.0
        %516 = vmatpush1.msra.mxu0 0.0
        %517 = vmatprep.subr.mxu0 0.0
        %518 = vmatpush1.msra.mxu0 0.0
        %519 = vmatprep.subr.mxu0 0.0
        %520 = vmatpush1.msra.mxu0 0.0
        %521 = vmatprep.subr.mxu0 0.0
        %522 = vmatpush1.msra.mxu0 0.0
        %523 = vmatprep.subr.mxu0 0.0
        %524 = vmatpush1.msra.mxu0 0.0
        %525 = vmatprep.subr.mxu0 0.0
        %526 = vmatpush1.msra.mxu0 0.0
        %527 = vmatprep.subr.mxu0 0.0
        %528 = vmatpush1.msra.mxu0 0.0
        %529 = vmatprep.subr.mxu0 0.0
        %530 = vmatpush1.msra.mxu0 0.0
        %531 = vmatprep.subr.mxu0 0.0
        %532 = vmatpush1.msra.mxu0 0.0
        %533 = vmatprep.subr.mxu0 0.0
        %534 = vmatpush1.msra.mxu0 0.0
        %535 = vmatprep.subr.mxu0 0.0
        %536 = vmatpush1.msra.mxu0 0.0
        %537 = vmatprep.subr.mxu0 0.0
        %538 = vmatpush1.msra.mxu0 0.0
        %539 = vmatprep.subr.mxu0 0.0
        %540 = vmatpush1.msra.mxu0 0.0
        %541 = vmatprep.mubr.f32.mxu0 0.0
        %542 = vmatmul.mubr.f32.gmra.mrb[0].mxu0 %v475
        %v543 = vpop.f32.mrb[0].mxu0
        %v544 = vadd.f32 0.0, %v543
        %v545 = vpop.f32.mrb[0].mxu0
        %546 = vdwg.mxu0
        %v547 = vmul.f32 %v544, %v440
        %vm548 = vcmask 523264
        %v550 = vsel %vm548, %v544, 0
        %552 = vmatprep.subr.mxu0 0.0
        %553 = vmatpush1.msra.mxu0 %v442
        %554 = vmatprep.subr.mxu0 0.0
        %555 = vmatpush1.msra.mxu0 %v443
        %556 = vmatprep.subr.mxu0 0.0
        %557 = vmatpush1.msra.mxu0 %v444
        %558 = vmatprep.subr.mxu0 0.0
        %559 = vmatpush1.msra.mxu0 %v445
        %560 = vmatprep.subr.mxu0 0.0
        %561 = vmatpush1.msra.mxu0 %v446
        %562 = vmatprep.subr.mxu0 0.0
        %563 = vmatpush1.msra.mxu0 %v447
        %564 = vmatprep.subr.mxu0 0.0
        %565 = vmatpush1.msra.mxu0 %v448
        %566 = vmatprep.subr.mxu0 0.0
        %567 = vmatpush1.msra.mxu0 %v449
        %568 = vmatprep.subr.mxu0 0.0
        %569 = vmatpush1.msra.mxu0 0.0
        %570 = vmatprep.subr.mxu0 0.0
        %571 = vmatpush1.msra.mxu0 0.0
        %572 = vmatprep.subr.mxu0 0.0
        %573 = vmatpush1.msra.mxu0 0.0
        %574 = vmatprep.subr.mxu0 0.0
        %575 = vmatpush1.msra.mxu0 0.0
        %576 = vmatprep.subr.mxu0 0.0
        %577 = vmatpush1.msra.mxu0 0.0
        %578 = vmatprep.subr.mxu0 0.0
        %579 = vmatpush1.msra.mxu0 0.0
        %580 = vmatprep.subr.mxu0 0.0
        %581 = vmatpush1.msra.mxu0 0.0
        %582 = vmatprep.subr.mxu0 0.0
        %583 = vmatpush1.msra.mxu0 0.0
        %584 = vmatprep.subr.mxu0 0.0
        %585 = vmatpush1.msra.mxu0 0.0
        %586 = vmatprep.subr.mxu0 0.0
        %587 = vmatpush1.msra.mxu0 0.0
        %588 = vmatprep.subr.mxu0 0.0
        %589 = vmatpush1.msra.mxu0 0.0
        %590 = vmatprep.subr.mxu0 0.0
        %591 = vmatpush1.msra.mxu0 0.0
        %592 = vmatprep.subr.mxu0 0.0
        %593 = vmatpush1.msra.mxu0 0.0
        %594 = vmatprep.subr.mxu0 0.0
        %595 = vmatpush1.msra.mxu0 0.0
        %596 = vmatprep.subr.mxu0 0.0
        %597 = vmatpush1.msra.mxu0 0.0
        %598 = vmatprep.subr.mxu0 0.0
        %599 = vmatpush1.msra.mxu0 0.0
        %600 = vmatprep.subr.mxu0 0.0
        %601 = vmatpush1.msra.mxu0 0.0
        %602 = vmatprep.subr.mxu0 0.0
        %603 = vmatpush1.msra.mxu0 0.0
        %604 = vmatprep.subr.mxu0 0.0
        %605 = vmatpush1.msra.mxu0 0.0
        %606 = vmatprep.subr.mxu0 0.0
        %607 = vmatpush1.msra.mxu0 0.0
        %608 = vmatprep.subr.mxu0 0.0
        %609 = vmatpush1.msra.mxu0 0.0
        %610 = vmatprep.subr.mxu0 0.0
        %611 = vmatpush1.msra.mxu0 0.0
        %612 = vmatprep.subr.mxu0 0.0
        %613 = vmatpush1.msra.mxu0 0.0
        %614 = vmatprep.subr.mxu0 0.0
        %615 = vmatpush1.msra.mxu0 0.0
        %616 = vmatprep.mubr.f32.mxu0 0.0
        %617 = vmatmul.mubr.f32.gmra.mrb[0].mxu0 %v550
        %v618 = vpop.f32.mrb[0].mxu0
        %v619 = vadd.f32 0.0, %v618
        %v620 = vpop.f32.mrb[0].mxu0
        %621 = vdwg.mxu0
        %v622 = vmul.f32 %v619, %v441
        %v623 = vadd.f32 %v547, %v622
        %625 = vrot.lane.b32.xlu0 %v623, 120
        %v626 = vpop.permute.xlu0 %625
        %627 = vrot.lane.b32.xlu0 %v623, 96
        %v628 = vpop.permute.xlu0 %627
        %vm629 = vcmask 64512
        %v630 = vsel %vm629, %v623, 0
        %v632 = vsel %vm629, %v626, 0
        %v634 = vsel %vm629, %v628, 0
        %636 = vmatprep.subr.mxu0 0.0
        %637 = vmatpush1.xpose.msra.mxu0 %v634
        %638 = vmatprep.subr.mxu0 0.0
        %639 = vmatpush1.xpose.msra.mxu0 0.0
        %640 = vmatprep.subr.mxu0 0.0
        %641 = vmatpush1.xpose.msra.mxu0 0.0
        %642 = vmatprep.subr.mxu0 0.0
        %643 = vmatpush1.xpose.msra.mxu0 0.0
        %644 = vmatprep.subr.mxu0 0.0
        %645 = vmatpush1.xpose.msra.mxu0 0.0
        %646 = vmatprep.subr.mxu0 0.0
        %647 = vmatpush1.xpose.msra.mxu0 0.0
        %648 = vmatprep.subr.mxu0 0.0
        %649 = vmatpush1.xpose.msra.mxu0 0.0
        %650 = vmatprep.subr.mxu0 0.0
        %651 = vmatpush1.xpose.msra.mxu0 0.0
        %652 = vmatprep.subr.mxu0 0.0
        %653 = vmatpush1.xpose.msra.mxu0 0.0
        %654 = vmatprep.subr.mxu0 0.0
        %655 = vmatpush1.xpose.msra.mxu0 0.0
        %656 = vmatprep.subr.mxu0 0.0
        %657 = vmatpush1.xpose.msra.mxu0 0.0
        %658 = vmatprep.subr.mxu0 0.0
        %659 = vmatpush1.xpose.msra.mxu0 0.0
        %660 = vmatprep.subr.mxu0 0.0
        %661 = vmatpush1.xpose.msra.mxu0 0.0
        %662 = vmatprep.subr.mxu0 0.0
        %663 = vmatpush1.xpose.msra.mxu0 0.0
        %664 = vmatprep.subr.mxu0 0.0
        %665 = vmatpush1.xpose.msra.mxu0 0.0
        %666 = vmatprep.subr.mxu0 0.0
        %667 = vmatpush1.xpose.msra.mxu0 0.0
        %668 = vmatprep.subr.mxu0 0.0
        %669 = vmatpush1.xpose.msra.mxu0 0.0
        %670 = vmatprep.subr.mxu0 0.0
        %671 = vmatpush1.xpose.msra.mxu0 0.0
        %672 = vmatprep.subr.mxu0 0.0
        %673 = vmatpush1.xpose.msra.mxu0 0.0
        %674 = vmatprep.subr.mxu0 0.0
        %675 = vmatpush1.xpose.msra.mxu0 0.0
        %676 = vmatprep.subr.mxu0 0.0
        %677 = vmatpush1.xpose.msra.mxu0 0.0
        %678 = vmatprep.subr.mxu0 0.0
        %679 = vmatpush1.xpose.msra.mxu0 0.0
        %680 = vmatprep.subr.mxu0 0.0
        %681 = vmatpush1.xpose.msra.mxu0 0.0
        %682 = vmatprep.subr.mxu0 0.0
        %683 = vmatpush1.xpose.msra.mxu0 0.0
        %684 = vmatprep.subr.mxu0 0.0
        %685 = vmatpush1.xpose.msra.mxu0 0.0
        %686 = vmatprep.subr.mxu0 0.0
        %687 = vmatpush1.xpose.msra.mxu0 0.0
        %688 = vmatprep.subr.mxu0 0.0
        %689 = vmatpush1.xpose.msra.mxu0 0.0
        %690 = vmatprep.subr.mxu0 0.0
        %691 = vmatpush1.xpose.msra.mxu0 0.0
        %692 = vmatprep.subr.mxu0 0.0
        %693 = vmatpush1.xpose.msra.mxu0 0.0
        %694 = vmatprep.subr.mxu0 0.0
        %695 = vmatpush1.xpose.msra.mxu0 0.0
        %696 = vmatprep.subr.mxu0 0.0
        %697 = vmatpush1.xpose.msra.mxu0 0.0
        %698 = vmatprep.subr.mxu0 0.0
        %699 = vmatpush1.xpose.msra.mxu0 0.0
        %700 = vmatprep.mubr.f32.mxu0 0.0
        %701 = vmatmul.mubr.f32.gmra.mrb[0].mxu0 %v630
        %v702 = vpop.f32.mrb[0].mxu0
        %v703 = vadd.f32 0.0, %v702
        %v704 = vpop.f32.mrb[0].mxu0
        %705 = vmatprep.mubr.f32.mxu0 0.0
        %706 = vmatmul.mubr.f32.gmra.mrb[0].mxu0 %v632
        %v707 = vpop.f32.mrb[0].mxu0
        %v708 = vadd.f32 0.0, %v707
        %v709 = vpop.f32.mrb[0].mxu0
        %710 = vdwg.mxu0
        %v711 = vmul.f32 %v703, 0.35355338
        %v712 = vmul.f32 %v708, 0.35355338
        %v713 = vadd.f32 %v711, %v450
        %v714 = vadd.f32 %v712, %v451
        %v715 = vsel %vm629, %v713, -inf
        %716 = vmax.xlane.f32.xlu0 %v715
        %v717 = vpop.xlane.xlu0 %716
        %v718 = vsel %vm629, %v714, -inf
        %719 = vmax.xlane.f32.xlu0 %v718
        %v720 = vpop.xlane.xlu0 %719
        %v721 = vsub.f32 %v713, %v717
        %v722 = vsub.f32 %v714, %v720
        %v723 = vmul.f32 %v721, 1.442695
        %v724 = vpow.pop %v723
        %v725 = vmul.f32 %v722, 1.442695
        %v726 = vpow.pop %v725
        %v727 = vsel %vm629, %v724, 0.0
        %728 = vadd.xlane.f32.xlu0 %v727
        %v729 = vpop.xlane.xlu0 %728
        %v730 = vsel %vm629, %v726, 0.0
        %731 = vadd.xlane.f32.xlu0 %v730
        %v732 = vpop.xlane.xlu0 %731
        %v733 = vrcp.pop %v729
        %v734 = vmul.f32 %v724, %v733
        %v735 = vrcp.pop %v732
        %v736 = vmul.f32 %v726, %v735
        %737 = vrot.lane.b32.xlu0 %v544, 80
        %v738 = vpop.permute.xlu0 %737
        %v741 = vsel %vm629, %v734, 0
        %v744 = vsel %vm629, %v736, 0
        %746 = vmatprep.subr.mxu0 0.0
        %747 = vmatpush1.msra.mxu0 %v738
        %748 = vmatprep.subr.mxu0 0.0
        %749 = vmatpush1.msra.mxu0 0.0
        %750 = vmatprep.subr.mxu0 0.0
        %751 = vmatpush1.msra.mxu0 0.0
        %752 = vmatprep.subr.mxu0 0.0
        %753 = vmatpush1.msra.mxu0 0.0
        %754 = vmatprep.subr.mxu0 0.0
        %755 = vmatpush1.msra.mxu0 0.0
        %756 = vmatprep.subr.mxu0 0.0
        %757 = vmatpush1.msra.mxu0 0.0
        %758 = vmatprep.subr.mxu0 0.0
        %759 = vmatpush1.msra.mxu0 0.0
        %760 = vmatprep.subr.mxu0 0.0
        %761 = vmatpush1.msra.mxu0 0.0
        %762 = vmatprep.subr.mxu0 0.0
        %763 = vmatpush1.msra.mxu0 0.0
        %764 = vmatprep.subr.mxu0 0.0
        %765 = vmatpush1.msra.mxu0 0.0
        %766 = vmatprep.subr.mxu0 0.0
        %767 = vmatpush1.msra.mxu0 0.0
        %768 = vmatprep.subr.mxu0 0.0
        %769 = vmatpush1.msra.mxu0 0.0
        %770 = vmatprep.subr.mxu0 0.0
        %771 = vmatpush1.msra.mxu0 0.0
        %772 = vmatprep.subr.mxu0 0.0
        %773 = vmatpush1.msra.mxu0 0.0
        %774 = vmatprep.subr.mxu0 0.0
        %775 = vmatpush1.msra.mxu0 0.0
        %776 = vmatprep.subr.mxu0 0.0
        %777 = vmatpush1.msra.mxu0 0.0
        %778 = vmatprep.subr.mxu0 0.0
        %779 = vmatpush1.msra.mxu0 0.0
        %780 = vmatprep.subr.mxu0 0.0
        %781 = vmatpush1.msra.mxu0 0.0
        %782 = vmatprep.subr.mxu0 0.0
        %783 = vmatpush1.msra.mxu0 0.0
        %784 = vmatprep.subr.mxu0 0.0
        %785 = vmatpush1.msra.mxu0 0.0
        %786 = vmatprep.subr.mxu0 0.0
        %787 = vmatpush1.msra.mxu0 0.0
        %788 = vmatprep.subr.mxu0 0.0
        %789 = vmatpush1.msra.mxu0 0.0
        %790 = vmatprep.subr.mxu0 0.0
        %791 = vmatpush1.msra.mxu0 0.0
        %792 = vmatprep.subr.mxu0 0.0
        %793 = vmatpush1.msra.mxu0 0.0
        %794 = vmatprep.subr.mxu0 0.0
        %795 = vmatpush1.msra.mxu0 0.0
        %796 = vmatprep.subr.mxu0 0.0
        %797 = vmatpush1.msra.mxu0 0.0
        %798 = vmatprep.subr.mxu0 0.0
        %799 = vmatpush1.msra.mxu0 0.0
        %800 = vmatprep.subr.mxu0 0.0
        %801 = vmatpush1.msra.mxu0 0.0
        %802 = vmatprep.subr.mxu0 0.0
        %803 = vmatpush1.msra.mxu0 0.0
        %804 = vmatprep.subr.mxu0 0.0
        %805 = vmatpush1.msra.mxu0 0.0
        %806 = vmatprep.subr.mxu0 0.0
        %807 = vmatpush1.msra.mxu0 0.0
        %808 = vmatprep.subr.mxu0 0.0
        %809 = vmatpush1.msra.mxu0 0.0
        %810 = vmatprep.mubr.f32.mxu0 0.0
        %811 = vmatmul.mubr.f32.gmra.mrb[0].mxu0 %v741
        %v812 = vpop.f32.mrb[0].mxu0
        %v813 = vadd.f32 0.0, %v812
        %v814 = vpop.f32.mrb[0].mxu0
        %815 = vmatprep.mubr.f32.mxu0 0.0
        %816 = vmatmul.mubr.f32.gmra.mrb[0].mxu0 %v744
        %v817 = vpop.f32.mrb[0].mxu0
        %v818 = vadd.f32 0.0, %v817
        %v819 = vpop.f32.mrb[0].mxu0
        %820 = vdwg.mxu0
        %821 = vrot.lane.b32.xlu0 %v623, 112
        %v822 = vpop.permute.xlu0 %821
        %823 = vrot.lane.b32.xlu0 %v626, 112
        %v824 = vpop.permute.xlu0 %823
        %825 = vrot.lane.b32.xlu0 %v623, 88
        %v826 = vpop.permute.xlu0 %825
        %v827 = vsel %vm629, %v822, 0
        %v829 = vsel %vm629, %v824, 0
        %v831 = vsel %vm629, %v826, 0
        %833 = vmatprep.subr.mxu0 0.0
        %834 = vmatpush1.xpose.msra.mxu0 %v831
        %835 = vmatprep.subr.mxu0 0.0
        %836 = vmatpush1.xpose.msra.mxu0 0.0
        %837 = vmatprep.subr.mxu0 0.0
        %838 = vmatpush1.xpose.msra.mxu0 0.0
        %839 = vmatprep.subr.mxu0 0.0
        %840 = vmatpush1.xpose.msra.mxu0 0.0
        %841 = vmatprep.subr.mxu0 0.0
        %842 = vmatpush1.xpose.msra.mxu0 0.0
        %843 = vmatprep.subr.mxu0 0.0
        %844 = vmatpush1.xpose.msra.mxu0 0.0
        %845 = vmatprep.subr.mxu0 0.0
        %846 = vmatpush1.xpose.msra.mxu0 0.0
        %847 = vmatprep.subr.mxu0 0.0
        %848 = vmatpush1.xpose.msra.mxu0 0.0
        %849 = vmatprep.subr.mxu0 0.0
        %850 = vmatpush1.xpose.msra.mxu0 0.0
        %851 = vmatprep.subr.mxu0 0.0
        %852 = vmatpush1.xpose.msra.mxu0 0.0
        %853 = vmatprep.subr.mxu0 0.0
        %854 = vmatpush1.xpose.msra.mxu0 0.0
        %855 = vmatprep.subr.mxu0 0.0
        %856 = vmatpush1.xpose.msra.mxu0 0.0
        %857 = vmatprep.subr.mxu0 0.0
        %858 = vmatpush1.xpose.msra.mxu0 0.0
        %859 = vmatprep.subr.mxu0 0.0
        %860 = vmatpush1.xpose.msra.mxu0 0.0
        %861 = vmatprep.subr.mxu0 0.0
        %862 = vmatpush1.xpose.msra.mxu0 0.0
        %863 = vmatprep.subr.mxu0 0.0
        %864 = vmatpush1.xpose.msra.mxu0 0.0
        %865 = vmatprep.subr.mxu0 0.0
        %866 = vmatpush1.xpose.msra.mxu0 0.0
        %867 = vmatprep.subr.mxu0 0.0
        %868 = vmatpush1.xpose.msra.mxu0 0.0
        %869 = vmatprep.subr.mxu0 0.0
        %870 = vmatpush1.xpose.msra.mxu0 0.0
        %871 = vmatprep.subr.mxu0 0.0
        %872 = vmatpush1.xpose.msra.mxu0 0.0
        %873 = vmatprep.subr.mxu0 0.0
        %874 = vmatpush1.xpose.msra.mxu0 0.0
        %875 = vmatprep.subr.mxu0 0.0
        %876 = vmatpush1.xpose.msra.mxu0 0.0
        %877 = vmatprep.subr.mxu0 0.0
        %878 = vmatpush1.xpose.msra.mxu0 0.0
        %879 = vmatprep.subr.mxu0 0.0
        %880 = vmatpush1.xpose.msra.mxu0 0.0
        %881 = vmatprep.subr.mxu0 0.0
        %882 = vmatpush1.xpose.msra.mxu0 0.0
        %883 = vmatprep.subr.mxu0 0.0
        %884 = vmatpush1.xpose.msra.mxu0 0.0
        %885 = vmatprep.subr.mxu0 0.0
        %886 = vmatpush1.xpose.msra.mxu0 0.0
        %887 = vmatprep.subr.mxu0 0.0
        %888 = vmatpush1.xpose.msra.mxu0 0.0
        %889 = vmatprep.subr.mxu0 0.0
        %890 = vmatpush1.xpose.msra.mxu0 0.0
        %891 = vmatprep.subr.mxu0 0.0
        %892 = vmatpush1.xpose.msra.mxu0 0.0
        %893 = vmatprep.subr.mxu0 0.0
        %894 = vmatpush1.xpose.msra.mxu0 0.0
        %895 = vmatprep.subr.mxu0 0.0
        %896 = vmatpush1.xpose.msra.mxu0 0.0
        %897 = vmatprep.mubr.f32.mxu0 0.0
        %898 = vmatmul.mubr.f32.gmra.mrb[0].mxu0 %v827
        %v899 = vpop.f32.mrb[0].mxu0
        %v900 = vadd.f32 0.0, %v899
        %v901 = vpop.f32.mrb[0].mxu0
        %902 = vmatprep.mubr.f32.mxu0 0.0
        %903 = vmatmul.mubr.f32.gmra.mrb[0].mxu0 %v829
        %v904 = vpop.f32.mrb[0].mxu0
        %v905 = vadd.f32 0.0, %v904
        %v906 = vpop.f32.mrb[0].mxu0
        %907 = vdwg.mxu0
        %v908 = vmul.f32 %v900, 0.35355338
        %v909 = vmul.f32 %v905, 0.35355338
        %v910 = vadd.f32 %v908, %v450
        %v911 = vadd.f32 %v909, %v451
        %v912 = vsel %vm629, %v910, -inf
        %913 = vmax.xlane.f32.xlu0 %v912
        %v914 = vpop.xlane.xlu0 %913
        %v915 = vsel %vm629, %v911, -inf
        %916 = vmax.xlane.f32.xlu0 %v915
        %v917 = vpop.xlane.xlu0 %916
        %v918 = vsub.f32 %v910, %v914
        %v919 = vsub.f32 %v911, %v917
        %v920 = vmul.f32 %v918, 1.442695
        %v921 = vpow.pop %v920
        %v922 = vmul.f32 %v919, 1.442695
        %v923 = vpow.pop %v922
        %v924 = vsel %vm629, %v921, 0.0
        %925 = vadd.xlane.f32.xlu0 %v924
        %v926 = vpop.xlane.xlu0 %925
        %v927 = vsel %vm629, %v923, 0.0
        %928 = vadd.xlane.f32.xlu0 %v927
        %v929 = vpop.xlane.xlu0 %928
        %v930 = vrcp.pop %v926
        %v931 = vmul.f32 %v921, %v930
        %v932 = vrcp.pop %v929
        %v933 = vmul.f32 %v923, %v932
        %934 = vrot.lane.b32.xlu0 %v544, 72
        %v935 = vpop.permute.xlu0 %934
        %v938 = vsel %vm629, %v931, 0
        %v941 = vsel %vm629, %v933, 0
        %943 = vmatprep.subr.mxu0 0.0
        %944 = vmatpush1.msra.mxu0 %v935
        %945 = vmatprep.subr.mxu0 0.0
        %946 = vmatpush1.msra.mxu0 0.0
        %947 = vmatprep.subr.mxu0 0.0
        %948 = vmatpush1.msra.mxu0 0.0
        %949 = vmatprep.subr.mxu0 0.0
        %950 = vmatpush1.msra.mxu0 0.0
        %951 = vmatprep.subr.mxu0 0.0
        %952 = vmatpush1.msra.mxu0 0.0
        %953 = vmatprep.subr.mxu0 0.0
        %954 = vmatpush1.msra.mxu0 0.0
        %955 = vmatprep.subr.mxu0 0.0
        %956 = vmatpush1.msra.mxu0 0.0
        %957 = vmatprep.subr.mxu0 0.0
        %958 = vmatpush1.msra.mxu0 0.0
        %959 = vmatprep.subr.mxu0 0.0
        %960 = vmatpush1.msra.mxu0 0.0
        %961 = vmatprep.subr.mxu0 0.0
        %962 = vmatpush1.msra.mxu0 0.0
        %963 = vmatprep.subr.mxu0 0.0
        %964 = vmatpush1.msra.mxu0 0.0
        %965 = vmatprep.subr.mxu0 0.0
        %966 = vmatpush1.msra.mxu0 0.0
        %967 = vmatprep.subr.mxu0 0.0
        %968 = vmatpush1.msra.mxu0 0.0
        %969 = vmatprep.subr.mxu0 0.0
        %970 = vmatpush1.msra.mxu0 0.0
        %971 = vmatprep.subr.mxu0 0.0
        %972 = vmatpush1.msra.mxu0 0.0
        %973 = vmatprep.subr.mxu0 0.0
        %974 = vmatpush1.msra.mxu0 0.0
        %975 = vmatprep.subr.mxu0 0.0
        %976 = vmatpush1.msra.mxu0 0.0
        %977 = vmatprep.subr.mxu0 0.0
        %978 = vmatpush1.msra.mxu0 0.0
        %979 = vmatprep.subr.mxu0 0.0
        %980 = vmatpush1.msra.mxu0 0.0
        %981 = vmatprep.subr.mxu0 0.0
        %982 = vmatpush1.msra.mxu0 0.0
        %983 = vmatprep.subr.mxu0 0.0
        %984 = vmatpush1.msra.mxu0 0.0
        %985 = vmatprep.subr.mxu0 0.0
        %986 = vmatpush1.msra.mxu0 0.0
        %987 = vmatprep.subr.mxu0 0.0
        %988 = vmatpush1.msra.mxu0 0.0
        %989 = vmatprep.subr.mxu0 0.0
        %990 = vmatpush1.msra.mxu0 0.0
        %991 = vmatprep.subr.mxu0 0.0
        %992 = vmatpush1.msra.mxu0 0.0
        %993 = vmatprep.subr.mxu0 0.0
        %994 = vmatpush1.msra.mxu0 0.0
        %995 = vmatprep.subr.mxu0 0.0
        %996 = vmatpush1.msra.mxu0 0.0
        %997 = vmatprep.subr.mxu0 0.0
        %998 = vmatpush1.msra.mxu0 0.0
        %999 = vmatprep.subr.mxu0 0.0
        %1000 = vmatpush1.msra.mxu0 0.0
        %1001 = vmatprep.subr.mxu0 0.0
        %1002 = vmatpush1.msra.mxu0 0.0
        %1003 = vmatprep.subr.mxu0 0.0
        %1004 = vmatpush1.msra.mxu0 0.0
        %1005 = vmatprep.subr.mxu0 0.0
        %1006 = vmatpush1.msra.mxu0 0.0
        %1007 = vmatprep.mubr.f32.mxu0 0.0
        %1008 = vmatmul.mubr.f32.gmra.mrb[0].mxu0 %v938
        %v1009 = vpop.f32.mrb[0].mxu0
        %v1010 = vadd.f32 0.0, %v1009
        %v1011 = vpop.f32.mrb[0].mxu0
        %1012 = vmatprep.mubr.f32.mxu0 0.0
        %1013 = vmatmul.mubr.f32.gmra.mrb[0].mxu0 %v941
        %v1014 = vpop.f32.mrb[0].mxu0
        %v1015 = vadd.f32 0.0, %v1014
        %v1016 = vpop.f32.mrb[0].mxu0
        %1017 = vdwg.mxu0
        %1019 = vrot.lane.b32.xlu0 %v818, 8
        %v1020 = vpop.permute.xlu0 %1019
        %1023 = vrot.lane.b32.xlu0 %v1010, 16
        %v1024 = vpop.permute.xlu0 %1023
        %1027 = vrot.lane.b32.xlu0 %v1015, 24
        %v1028 = vpop.permute.xlu0 %1027
        %v1030 = vsel %vm629, %v813, %v1020
        %vm1031 = vcmask 130048
        %v1032 = vsel %vm1031, %v1030, %v1024
        %vm1033 = vcmask 195584
        %v1034 = vsel %vm1033, %v1032, %v1028
        %v1035 = vld [vmem:[%s3] sm:$0xff]
        %v1036 = vld [vmem:[%s3 + $0x8] sm:$0xff]
        %v1037 = vld [vmem:[%s3 + $0x10] sm:$0xff]
        %v1038 = vld [vmem:[%s3 + $0x18] sm:$0xff]
        %v1040 = vsel %vm454, %v1034, 0
        %1042 = vmatprep.subr.mxu0 0.0
        %1043 = vmatpush1.msra.mxu0 %v1035
        %1044 = vmatprep.subr.mxu0 0.0
        %1045 = vmatpush1.msra.mxu0 %v1036
        %1046 = vmatprep.subr.mxu0 0.0
        %1047 = vmatpush1.msra.mxu0 %v1037
        %1048 = vmatprep.subr.mxu0 0.0
        %1049 = vmatpush1.msra.mxu0 %v1038
        %1050 = vmatprep.subr.mxu0 0.0
        %1051 = vmatpush1.msra.mxu0 0.0
        %1052 = vmatprep.subr.mxu0 0.0
        %1053 = vmatpush1.msra.mxu0 0.0
        %1054 = vmatprep.subr.mxu0 0.0
        %1055 = vmatpush1.msra.mxu0 0.0
        %1056 = vmatprep.subr.mxu0 0.0
        %1057 = vmatpush1.msra.mxu0 0.0
        %1058 = vmatprep.subr.mxu0 0.0
        %1059 = vmatpush1.msra.mxu0 0.0
        %1060 = vmatprep.subr.mxu0 0.0
        %1061 = vmatpush1.msra.mxu0 0.0
        %1062 = vmatprep.subr.mxu0 0.0
        %1063 = vmatpush1.msra.mxu0 0.0
        %1064 = vmatprep.subr.mxu0 0.0
        %1065 = vmatpush1.msra.mxu0 0.0
        %1066 = vmatprep.subr.mxu0 0.0
        %1067 = vmatpush1.msra.mxu0 0.0
        %1068 = vmatprep.subr.mxu0 0.0
        %1069 = vmatpush1.msra.mxu0 0.0
        %1070 = vmatprep.subr.mxu0 0.0
        %1071 = vmatpush1.msra.mxu0 0.0
        %1072 = vmatprep.subr.mxu0 0.0
        %1073 = vmatpush1.msra.mxu0 0.0
        %1074 = vmatprep.subr.mxu0 0.0
        %1075 = vmatpush1.msra.mxu0 0.0
        %1076 = vmatprep.subr.mxu0 0.0
        %1077 = vmatpush1.msra.mxu0 0.0
        %1078 = vmatprep.subr.mxu0 0.0
        %1079 = vmatpush1.msra.mxu0 0.0
        %1080 = vmatprep.subr.mxu0 0.0
        %1081 = vmatpush1.msra.mxu0 0.0
        %1082 = vmatprep.subr.mxu0 0.0
        %1083 = vmatpush1.msra.mxu0 0.0
        %1084 = vmatprep.subr.mxu0 0.0
        %1085 = vmatpush1.msra.mxu0 0.0
        %1086 = vmatprep.subr.mxu0 0.0
        %1087 = vmatpush1.msra.mxu0 0.0
        %1088 = vmatprep.subr.mxu0 0.0
        %1089 = vmatpush1.msra.mxu0 0.0
        %1090 = vmatprep.subr.mxu0 0.0
        %1091 = vmatpush1.msra.mxu0 0.0
        %1092 = vmatprep.subr.mxu0 0.0
        %1093 = vmatpush1.msra.mxu0 0.0
        %1094 = vmatprep.subr.mxu0 0.0
        %1095 = vmatpush1.msra.mxu0 0.0
        %1096 = vmatprep.subr.mxu0 0.0
        %1097 = vmatpush1.msra.mxu0 0.0
        %1098 = vmatprep.subr.mxu0 0.0
        %1099 = vmatpush1.msra.mxu0 0.0
        %1100 = vmatprep.subr.mxu0 0.0
        %1101 = vmatpush1.msra.mxu0 0.0
        %1102 = vmatprep.subr.mxu0 0.0
        %1103 = vmatpush1.msra.mxu0 0.0
        %1104 = vmatprep.subr.mxu0 0.0
        %1105 = vmatpush1.msra.mxu0 0.0
        %1106 = vmatprep.mubr.f32.mxu0 0.0
        %1107 = vmatmul.mubr.f32.gmra.mrb[0].mxu0 %v1040
        %v1108 = vpop.f32.mrb[0].mxu0
        %v1109 = vadd.f32 0.0, %v1108
        %v1110 = vpop.f32.mrb[0].mxu0
        %1111 = vdwg.mxu0
        %v1112 = vadd.f32 %v439, %v1109
        %v1113 = vld [vmem:[#allocation2] sm:$0x1]
        %v1114 = vmul.f32 %v1112, %v1112
        %v1115 = vsel %vm454, %v1114, 0.0
        %1116 = vadd.xlane.f32.xlu0 %v1115
        %v1117 = vpop.xlane.xlu0 %1116
        %v1118 = vmul.f32 %v1117, %v458
        %v1119 = vadd.f32 %v1118, 1e-06
        %v1120 = vrsqrt.pop %v1119
        %v1121 = vmul.f32 %v1112, %v1120
        %v1123 = vlaneseq
        %v1124 = vshrl.u32 %v1123, 7
        %v1125 = vsub.s32 0, %v1124
        %v1126 = vrot.slane %v1113, %v1125
        %v1128 = vmul.f32 %v1121, %v1126
        %v1129 = vld [vmem:[%s5] sm:$0xff]
        %v1130 = vld [vmem:[%s5 + $0x8] sm:$0xff]
        %v1131 = vld [vmem:[%s5 + $0x10] sm:$0xff]
        %v1132 = vld [vmem:[%s5 + $0x18] sm:$0xff]
        %v1134 = vsel %vm454, %v1128, 0
        %1136 = vmatprep.subr.mxu0 0.0
        %1137 = vmatpush1.msra.mxu0 %v1129
        %1138 = vmatprep.subr.mxu0 0.0
        %1139 = vmatpush1.msra.mxu0 %v1130
        %1140 = vmatprep.subr.mxu0 0.0
        %1141 = vmatpush1.msra.mxu0 %v1131
        %1142 = vmatprep.subr.mxu0 0.0
        %1143 = vmatpush1.msra.mxu0 %v1132
        %1144 = vmatprep.subr.mxu0 0.0
        %1145 = vmatpush1.msra.mxu0 0.0
        %1146 = vmatprep.subr.mxu0 0.0
        %1147 = vmatpush1.msra.mxu0 0.0
        %1148 = vmatprep.subr.mxu0 0.0
        %1149 = vmatpush1.msra.mxu0 0.0
        %1150 = vmatprep.subr.mxu0 0.0
        %1151 = vmatpush1.msra.mxu0 0.0
        %1152 = vmatprep.subr.mxu0 0.0
        %1153 = vmatpush1.msra.mxu0 0.0
        %1154 = vmatprep.subr.mxu0 0.0
        %1155 = vmatpush1.msra.mxu0 0.0
        %1156 = vmatprep.subr.mxu0 0.0
        %1157 = vmatpush1.msra.mxu0 0.0
        %1158 = vmatprep.subr.mxu0 0.0
        %1159 = vmatpush1.msra.mxu0 0.0
        %1160 = vmatprep.subr.mxu0 0.0
        %1161 = vmatpush1.msra.mxu0 0.0
        %1162 = vmatprep.subr.mxu0 0.0
        %1163 = vmatpush1.msra.mxu0 0.0
        %1164 = vmatprep.subr.mxu0 0.0
        %1165 = vmatpush1.msra.mxu0 0.0
        %1166 = vmatprep.subr.mxu0 0.0
        %1167 = vmatpush1.msra.mxu0 0.0
        %1168 = vmatprep.subr.mxu0 0.0
        %1169 = vmatpush1.msra.mxu0 0.0
        %1170 = vmatprep.subr.mxu0 0.0
        %1171 = vmatpush1.msra.mxu0 0.0
        %1172 = vmatprep.subr.mxu0 0.0
        %1173 = vmatpush1.msra.mxu0 0.0
        %1174 = vmatprep.subr.mxu0 0.0
        %1175 = vmatpush1.msra.mxu0 0.0
        %1176 = vmatprep.subr.mxu0 0.0
        %1177 = vmatpush1.msra.mxu0 0.0
        %1178 = vmatprep.subr.mxu0 0.0
        %1179 = vmatpush1.msra.mxu0 0.0
        %1180 = vmatprep.subr.mxu0 0.0
        %1181 = vmatpush1.msra.mxu0 0.0
        %1182 = vmatprep.subr.mxu0 0.0
        %1183 = vmatpush1.msra.mxu0 0.0
        %1184 = vmatprep.subr.mxu0 0.0
        %1185 = vmatpush1.msra.mxu0 0.0
        %1186 = vmatprep.subr.mxu0 0.0
        %1187 = vmatpush1.msra.mxu0 0.0
        %1188 = vmatprep.subr.mxu0 0.0
        %1189 = vmatpush1.msra.mxu0 0.0
        %1190 = vmatprep.subr.mxu0 0.0
        %1191 = vmatpush1.msra.mxu0 0.0
        %1192 = vmatprep.subr.mxu0 0.0
        %1193 = vmatpush1.msra.mxu0 0.0
        %1194 = vmatprep.subr.mxu0 0.0
        %1195 = vmatpush1.msra.mxu0 0.0
        %1196 = vmatprep.subr.mxu0 0.0
        %1197 = vmatpush1.msra.mxu0 0.0
        %1198 = vmatprep.subr.mxu0 0.0
        %1199 = vmatpush1.msra.mxu0 0.0
        %1200 = vmatprep.mubr.f32.mxu0 0.0
        %1201 = vmatmul.mubr.f32.gmra.mrb[0].mxu0 %v1134
        %v1202 = vpop.f32.mrb[0].mxu0
        %v1203 = vadd.f32 0.0, %v1202
        %v1204 = vpop.f32.mrb[0].mxu0
        %1205 = vdwg.mxu0
        %v1206 = vxor.u32 %v1203, 2147483648
        %v1207 = vmul.f32 %v1206, 1.442695
        %v1208 = vpow.pop %v1207
        %v1209 = vadd.f32 %v1208, 1.0
        %v1210 = vrcp.pop %v1209
        %v1211 = vmul.f32 1.0, %v1210
        %v1212 = vmul.f32 %v1203, %v1211
        %1214 = vrot.lane.b32.xlu0 %v1203, 64
        %v1215 = vpop.permute.xlu0 %1214
        %v1217 = vmul.f32 %v1212, %v1215
        %v1218 = vld [vmem:[%s6] sm:$0xff]
        %v1219 = vld [vmem:[%s6 + $0x8] sm:$0xff]
        %v1220 = vld [vmem:[%s6 + $0x10] sm:$0xff]
        %v1221 = vld [vmem:[%s6 + $0x18] sm:$0xff]
        %v1222 = vld [vmem:[%s6 + $0x20] sm:$0xff]
        %v1223 = vld [vmem:[%s6 + $0x28] sm:$0xff]
        %v1224 = vld [vmem:[%s6 + $0x30] sm:$0xff]
        %v1225 = vld [vmem:[%s6 + $0x38] sm:$0xff]
        %v1227 = vsel %vm548, %v1217, 0
        %1229 = vmatprep.subr.mxu0 0.0
        %1230 = vmatpush1.msra.mxu0 %v1218
        %1231 = vmatprep.subr.mxu0 0.0
        %1232 = vmatpush1.msra.mxu0 %v1219
        %1233 = vmatprep.subr.mxu0 0.0
        %1234 = vmatpush1.msra.mxu0 %v1220
        %1235 = vmatprep.subr.mxu0 0.0
        %1236 = vmatpush1.msra.mxu0 %v1221
        %1237 = vmatprep.subr.mxu0 0.0
        %1238 = vmatpush1.msra.mxu0 %v1222
        %1239 = vmatprep.subr.mxu0 0.0
        %1240 = vmatpush1.msra.mxu0 %v1223
        %1241 = vmatprep.subr.mxu0 0.0
        %1242 = vmatpush1.msra.mxu0 %v1224
        %1243 = vmatprep.subr.mxu0 0.0
        %1244 = vmatpush1.msra.mxu0 %v1225
        %1245 = vmatprep.subr.mxu0 0.0
        %1246 = vmatpush1.msra.mxu0 0.0
        %1247 = vmatprep.subr.mxu0 0.0
        %1248 = vmatpush1.msra.mxu0 0.0
        %1249 = vmatprep.subr.mxu0 0.0
        %1250 = vmatpush1.msra.mxu0 0.0
        %1251 = vmatprep.subr.mxu0 0.0
        %1252 = vmatpush1.msra.mxu0 0.0
        %1253 = vmatprep.subr.mxu0 0.0
        %1254 = vmatpush1.msra.mxu0 0.0
        %1255 = vmatprep.subr.mxu0 0.0
        %1256 = vmatpush1.msra.mxu0 0.0
        %1257 = vmatprep.subr.mxu0 0.0
        %1258 = vmatpush1.msra.mxu0 0.0
        %1259 = vmatprep.subr.mxu0 0.0
        %1260 = vmatpush1.msra.mxu0 0.0
        %1261 = vmatprep.subr.mxu0 0.0
        %1262 = vmatpush1.msra.mxu0 0.0
        %1263 = vmatprep.subr.mxu0 0.0
        %1264 = vmatpush1.msra.mxu0 0.0
        %1265 = vmatprep.subr.mxu0 0.0
        %1266 = vmatpush1.msra.mxu0 0.0
        %1267 = vmatprep.subr.mxu0 0.0
        %1268 = vmatpush1.msra.mxu0 0.0
        %1269 = vmatprep.subr.mxu0 0.0
        %1270 = vmatpush1.msra.mxu0 0.0
        %1271 = vmatprep.subr.mxu0 0.0
        %1272 = vmatpush1.msra.mxu0 0.0
        %1273 = vmatprep.subr.mxu0 0.0
        %1274 = vmatpush1.msra.mxu0 0.0
        %1275 = vmatprep.subr.mxu0 0.0
        %1276 = vmatpush1.msra.mxu0 0.0
        %1277 = vmatprep.subr.mxu0 0.0
        %1278 = vmatpush1.msra.mxu0 0.0
        %1279 = vmatprep.subr.mxu0 0.0
        %1280 = vmatpush1.msra.mxu0 0.0
        %1281 = vmatprep.subr.mxu0 0.0
        %1282 = vmatpush1.msra.mxu0 0.0
        %1283 = vmatprep.subr.mxu0 0.0
        %1284 = vmatpush1.msra.mxu0 0.0
        %1285 = vmatprep.subr.mxu0 0.0
        %1286 = vmatpush1.msra.mxu0 0.0
        %1287 = vmatprep.subr.mxu0 0.0
        %1288 = vmatpush1.msra.mxu0 0.0
        %1289 = vmatprep.subr.mxu0 0.0
        %1290 = vmatpush1.msra.mxu0 0.0
        %1291 = vmatprep.subr.mxu0 0.0
        %1292 = vmatpush1.msra.mxu0 0.0
        %1293 = vmatprep.mubr.f32.mxu0 0.0
        %1294 = vmatmul.mubr.f32.gmra.mrb[0].mxu0 %v1227
        %v1295 = vpop.f32.mrb[0].mxu0
        %v1296 = vadd.f32 0.0, %v1295
        %v1297 = vpop.f32.mrb[0].mxu0
        %1298 = vdwg.mxu0
        %v1299 = vadd.f32 %v1112, %v1296
        %s1300 = scalar_lea.vmem %s1, 1
        %v1301 = vld [vmem:[%s1300] sm:$0x1]
        %v1302 = vmul.f32 %v1299, %v1299
        %v1303 = vsel %vm454, %v1302, 0.0
        %1304 = vadd.xlane.f32.xlu0 %v1303
        %v1305 = vpop.xlane.xlu0 %1304
        %v1306 = vmul.f32 %v1305, %v458
        %v1307 = vadd.f32 %v1306, 1e-06
        %v1308 = vrsqrt.pop %v1307
        %v1309 = vmul.f32 %v1299, %v1308
        %v1311 = vlaneseq
        %v1312 = vshrl.u32 %v1311, 7
        %v1313 = vsub.s32 0, %v1312
        %v1314 = vrot.slane %v1301, %v1313
        %v1316 = vmul.f32 %v1309, %v1314
        %s1317 = scalar_lea.vmem %s2, 32
        %v1318 = vld [vmem:[%s1317] sm:$0xff]
        %v1319 = vld [vmem:[%s1317 + $0x8] sm:$0xff]
        %v1320 = vld [vmem:[%s1317 + $0x10] sm:$0xff]
        %v1321 = vld [vmem:[%s1317 + $0x18] sm:$0xff]
        %v1323 = vsel %vm454, %v1316, 0
        %1325 = vmatprep.subr.mxu0 0.0
        %1326 = vmatpush1.msra.mxu0 %v1318
        %1327 = vmatprep.subr.mxu0 0.0
        %1328 = vmatpush1.msra.mxu0 %v1319
        %1329 = vmatprep.subr.mxu0 0.0
        %1330 = vmatpush1.msra.mxu0 %v1320
        %1331 = vmatprep.subr.mxu0 0.0
        %1332 = vmatpush1.msra.mxu0 %v1321
        %1333 = vmatprep.subr.mxu0 0.0
        %1334 = vmatpush1.msra.mxu0 0.0
        %1335 = vmatprep.subr.mxu0 0.0
        %1336 = vmatpush1.msra.mxu0 0.0
        %1337 = vmatprep.subr.mxu0 0.0
        %1338 = vmatpush1.msra.mxu0 0.0
        %1339 = vmatprep.subr.mxu0 0.0
        %1340 = vmatpush1.msra.mxu0 0.0
        %1341 = vmatprep.subr.mxu0 0.0
        %1342 = vmatpush1.msra.mxu0 0.0
        %1343 = vmatprep.subr.mxu0 0.0
        %1344 = vmatpush1.msra.mxu0 0.0
        %1345 = vmatprep.subr.mxu0 0.0
        %1346 = vmatpush1.msra.mxu0 0.0
        %1347 = vmatprep.subr.mxu0 0.0
        %1348 = vmatpush1.msra.mxu0 0.0
        %1349 = vmatprep.subr.mxu0 0.0
        %1350 = vmatpush1.msra.mxu0 0.0
        %1351 = vmatprep.subr.mxu0 0.0
        %1352 = vmatpush1.msra.mxu0 0.0
        %1353 = vmatprep.subr.mxu0 0.0
        %1354 = vmatpush1.msra.mxu0 0.0
        %1355 = vmatprep.subr.mxu0 0.0
        %1356 = vmatpush1.msra.mxu0 0.0
        %1357 = vmatprep.subr.mxu0 0.0
        %1358 = vmatpush1.msra.mxu0 0.0
        %1359 = vmatprep.subr.mxu0 0.0
        %1360 = vmatpush1.msra.mxu0 0.0
        %1361 = vmatprep.subr.mxu0 0.0
        %1362 = vmatpush1.msra.mxu0 0.0
        %1363 = vmatprep.subr.mxu0 0.0
        %1364 = vmatpush1.msra.mxu0 0.0
        %1365 = vmatprep.subr.mxu0 0.0
        %1366 = vmatpush1.msra.mxu0 0.0
        %1367 = vmatprep.subr.mxu0 0.0
        %1368 = vmatpush1.msra.mxu0 0.0
        %1369 = vmatprep.subr.mxu0 0.0
        %1370 = vmatpush1.msra.mxu0 0.0
        %1371 = vmatprep.subr.mxu0 0.0
        %1372 = vmatpush1.msra.mxu0 0.0
        %1373 = vmatprep.subr.mxu0 0.0
        %1374 = vmatpush1.msra.mxu0 0.0
        %1375 = vmatprep.subr.mxu0 0.0
        %1376 = vmatpush1.msra.mxu0 0.0
        %1377 = vmatprep.subr.mxu0 0.0
        %1378 = vmatpush1.msra.mxu0 0.0
        %1379 = vmatprep.subr.mxu0 0.0
        %1380 = vmatpush1.msra.mxu0 0.0
        %1381 = vmatprep.subr.mxu0 0.0
        %1382 = vmatpush1.msra.mxu0 0.0
        %1383 = vmatprep.subr.mxu0 0.0
        %1384 = vmatpush1.msra.mxu0 0.0
        %1385 = vmatprep.subr.mxu0 0.0
        %1386 = vmatpush1.msra.mxu0 0.0
        %1387 = vmatprep.subr.mxu0 0.0
        %1388 = vmatpush1.msra.mxu0 0.0
        %1389 = vmatprep.mubr.f32.mxu0 0.0
        %1390 = vmatmul.mubr.f32.gmra.mrb[0].mxu0 %v1323
        %v1391 = vpop.f32.mrb[0].mxu0
        %v1392 = vadd.f32 0.0, %v1391
        %v1393 = vpop.f32.mrb[0].mxu0
        %1394 = vdwg.mxu0
        %v1395 = vmul.f32 %v1392, %v440
        %v1397 = vsel %vm548, %v1392, 0
        %1399 = vmatprep.subr.mxu0 0.0
        %1400 = vmatpush1.msra.mxu0 %v442
        %1401 = vmatprep.subr.mxu0 0.0
        %1402 = vmatpush1.msra.mxu0 %v443
        %1403 = vmatprep.subr.mxu0 0.0
        %1404 = vmatpush1.msra.mxu0 %v444
        %1405 = vmatprep.subr.mxu0 0.0
        %1406 = vmatpush1.msra.mxu0 %v445
        %1407 = vmatprep.subr.mxu0 0.0
        %1408 = vmatpush1.msra.mxu0 %v446
        %1409 = vmatprep.subr.mxu0 0.0
        %1410 = vmatpush1.msra.mxu0 %v447
        %1411 = vmatprep.subr.mxu0 0.0
        %1412 = vmatpush1.msra.mxu0 %v448
        %1413 = vmatprep.subr.mxu0 0.0
        %1414 = vmatpush1.msra.mxu0 %v449
        %1415 = vmatprep.subr.mxu0 0.0
        %1416 = vmatpush1.msra.mxu0 0.0
        %1417 = vmatprep.subr.mxu0 0.0
        %1418 = vmatpush1.msra.mxu0 0.0
        %1419 = vmatprep.subr.mxu0 0.0
        %1420 = vmatpush1.msra.mxu0 0.0
        %1421 = vmatprep.subr.mxu0 0.0
        %1422 = vmatpush1.msra.mxu0 0.0
        %1423 = vmatprep.subr.mxu0 0.0
        %1424 = vmatpush1.msra.mxu0 0.0
        %1425 = vmatprep.subr.mxu0 0.0
        %1426 = vmatpush1.msra.mxu0 0.0
        %1427 = vmatprep.subr.mxu0 0.0
        %1428 = vmatpush1.msra.mxu0 0.0
        %1429 = vmatprep.subr.mxu0 0.0
        %1430 = vmatpush1.msra.mxu0 0.0
        %1431 = vmatprep.subr.mxu0 0.0
        %1432 = vmatpush1.msra.mxu0 0.0
        %1433 = vmatprep.subr.mxu0 0.0
        %1434 = vmatpush1.msra.mxu0 0.0
        %1435 = vmatprep.subr.mxu0 0.0
        %1436 = vmatpush1.msra.mxu0 0.0
        %1437 = vmatprep.subr.mxu0 0.0
        %1438 = vmatpush1.msra.mxu0 0.0
        %1439 = vmatprep.subr.mxu0 0.0
        %1440 = vmatpush1.msra.mxu0 0.0
        %1441 = vmatprep.subr.mxu0 0.0
        %1442 = vmatpush1.msra.mxu0 0.0
        %1443 = vmatprep.subr.mxu0 0.0
        %1444 = vmatpush1.msra.mxu0 0.0
        %1445 = vmatprep.subr.mxu0 0.0
        %1446 = vmatpush1.msra.mxu0 0.0
        %1447 = vmatprep.subr.mxu0 0.0
        %1448 = vmatpush1.msra.mxu0 0.0
        %1449 = vmatprep.subr.mxu0 0.0
        %1450 = vmatpush1.msra.mxu0 0.0
        %1451 = vmatprep.subr.mxu0 0.0
        %1452 = vmatpush1.msra.mxu0 0.0
        %1453 = vmatprep.subr.mxu0 0.0
        %1454 = vmatpush1.msra.mxu0 0.0
        %1455 = vmatprep.subr.mxu0 0.0
        %1456 = vmatpush1.msra.mxu0 0.0
        %1457 = vmatprep.subr.mxu0 0.0
        %1458 = vmatpush1.msra.mxu0 0.0
        %1459 = vmatprep.subr.mxu0 0.0
        %1460 = vmatpush1.msra.mxu0 0.0
        %1461 = vmatprep.subr.mxu0 0.0
        %1462 = vmatpush1.msra.mxu0 0.0
        %1463 = vmatprep.mubr.f32.mxu0 0.0
        %1464 = vmatmul.mubr.f32.gmra.mrb[0].mxu0 %v1397
        %v1465 = vpop.f32.mrb[0].mxu0
        %v1466 = vadd.f32 0.0, %v1465
        %v1467 = vpop.f32.mrb[0].mxu0
        %1468 = vdwg.mxu0
        %v1469 = vmul.f32 %v1466, %v441
        %v1470 = vadd.f32 %v1395, %v1469
        %1472 = vrot.lane.b32.xlu0 %v1470, 120
        %v1473 = vpop.permute.xlu0 %1472
        %1474 = vrot.lane.b32.xlu0 %v1470, 96
        %v1475 = vpop.permute.xlu0 %1474
        %v1476 = vsel %vm629, %v1470, 0
        %v1478 = vsel %vm629, %v1473, 0
        %v1480 = vsel %vm629, %v1475, 0
        %1482 = vmatprep.subr.mxu0 0.0
        %1483 = vmatpush1.xpose.msra.mxu0 %v1480
        %1484 = vmatprep.subr.mxu0 0.0
        %1485 = vmatpush1.xpose.msra.mxu0 0.0
        %1486 = vmatprep.subr.mxu0 0.0
        %1487 = vmatpush1.xpose.msra.mxu0 0.0
        %1488 = vmatprep.subr.mxu0 0.0
        %1489 = vmatpush1.xpose.msra.mxu0 0.0
        %1490 = vmatprep.subr.mxu0 0.0
        %1491 = vmatpush1.xpose.msra.mxu0 0.0
        %1492 = vmatprep.subr.mxu0 0.0
        %1493 = vmatpush1.xpose.msra.mxu0 0.0
        %1494 = vmatprep.subr.mxu0 0.0
        %1495 = vmatpush1.xpose.msra.mxu0 0.0
        %1496 = vmatprep.subr.mxu0 0.0
        %1497 = vmatpush1.xpose.msra.mxu0 0.0
        %1498 = vmatprep.subr.mxu0 0.0
        %1499 = vmatpush1.xpose.msra.mxu0 0.0
        %1500 = vmatprep.subr.mxu0 0.0
        %1501 = vmatpush1.xpose.msra.mxu0 0.0
        %1502 = vmatprep.subr.mxu0 0.0
        %1503 = vmatpush1.xpose.msra.mxu0 0.0
        %1504 = vmatprep.subr.mxu0 0.0
        %1505 = vmatpush1.xpose.msra.mxu0 0.0
        %1506 = vmatprep.subr.mxu0 0.0
        %1507 = vmatpush1.xpose.msra.mxu0 0.0
        %1508 = vmatprep.subr.mxu0 0.0
        %1509 = vmatpush1.xpose.msra.mxu0 0.0
        %1510 = vmatprep.subr.mxu0 0.0
        %1511 = vmatpush1.xpose.msra.mxu0 0.0
        %1512 = vmatprep.subr.mxu0 0.0
        %1513 = vmatpush1.xpose.msra.mxu0 0.0
        %1514 = vmatprep.subr.mxu0 0.0
        %1515 = vmatpush1.xpose.msra.mxu0 0.0
        %1516 = vmatprep.subr.mxu0 0.0
        %1517 = vmatpush1.xpose.msra.mxu0 0.0
        %1518 = vmatprep.subr.mxu0 0.0
        %1519 = vmatpush1.xpose.msra.mxu0 0.0
        %1520 = vmatprep.subr.mxu0 0.0
        %1521 = vmatpush1.xpose.msra.mxu0 0.0
        %1522 = vmatprep.subr.mxu0 0.0
        %1523 = vmatpush1.xpose.msra.mxu0 0.0
        %1524 = vmatprep.subr.mxu0 0.0
        %1525 = vmatpush1.xpose.msra.mxu0 0.0
        %1526 = vmatprep.subr.mxu0 0.0
        %1527 = vmatpush1.xpose.msra.mxu0 0.0
        %1528 = vmatprep.subr.mxu0 0.0
        %1529 = vmatpush1.xpose.msra.mxu0 0.0
        %1530 = vmatprep.subr.mxu0 0.0
        %1531 = vmatpush1.xpose.msra.mxu0 0.0
        %1532 = vmatprep.subr.mxu0 0.0
        %1533 = vmatpush1.xpose.msra.mxu0 0.0
        %1534 = vmatprep.subr.mxu0 0.0
        %1535 = vmatpush1.xpose.msra.mxu0 0.0
        %1536 = vmatprep.subr.mxu0 0.0
        %1537 = vmatpush1.xpose.msra.mxu0 0.0
        %1538 = vmatprep.subr.mxu0 0.0
        %1539 = vmatpush1.xpose.msra.mxu0 0.0
        %1540 = vmatprep.subr.mxu0 0.0
        %1541 = vmatpush1.xpose.msra.mxu0 0.0
        %1542 = vmatprep.subr.mxu0 0.0
        %1543 = vmatpush1.xpose.msra.mxu0 0.0
        %1544 = vmatprep.subr.mxu0 0.0
        %1545 = vmatpush1.xpose.msra.mxu0 0.0
        %1546 = vmatprep.mubr.f32.mxu0 0.0
        %1547 = vmatmul.mubr.f32.gmra.mrb[0].mxu0 %v1476
        %v1548 = vpop.f32.mrb[0].mxu0
        %v1549 = vadd.f32 0.0, %v1548
        %v1550 = vpop.f32.mrb[0].mxu0
        %1551 = vmatprep.mubr.f32.mxu0 0.0
        %1552 = vmatmul.mubr.f32.gmra.mrb[0].mxu0 %v1478
        %v1553 = vpop.f32.mrb[0].mxu0
        %v1554 = vadd.f32 0.0, %v1553
        %v1555 = vpop.f32.mrb[0].mxu0
        %1556 = vdwg.mxu0
        %v1557 = vmul.f32 %v1549, 0.35355338
        %v1558 = vmul.f32 %v1554, 0.35355338
        %v1559 = vadd.f32 %v1557, %v450
        %v1560 = vadd.f32 %v1558, %v451
        %v1561 = vsel %vm629, %v1559, -inf
        %1562 = vmax.xlane.f32.xlu0 %v1561
        %v1563 = vpop.xlane.xlu0 %1562
        %v1564 = vsel %vm629, %v1560, -inf
        %1565 = vmax.xlane.f32.xlu0 %v1564
        %v1566 = vpop.xlane.xlu0 %1565
        %v1567 = vsub.f32 %v1559, %v1563
        %v1568 = vsub.f32 %v1560, %v1566
        %v1569 = vmul.f32 %v1567, 1.442695
        %v1570 = vpow.pop %v1569
        %v1571 = vmul.f32 %v1568, 1.442695
        %v1572 = vpow.pop %v1571
        %v1573 = vsel %vm629, %v1570, 0.0
        %1574 = vadd.xlane.f32.xlu0 %v1573
        %v1575 = vpop.xlane.xlu0 %1574
        %v1576 = vsel %vm629, %v1572, 0.0
        %1577 = vadd.xlane.f32.xlu0 %v1576
        %v1578 = vpop.xlane.xlu0 %1577
        %v1579 = vrcp.pop %v1575
        %v1580 = vmul.f32 %v1570, %v1579
        %v1581 = vrcp.pop %v1578
        %v1582 = vmul.f32 %v1572, %v1581
        %1583 = vrot.lane.b32.xlu0 %v1392, 80
        %v1584 = vpop.permute.xlu0 %1583
        %v1587 = vsel %vm629, %v1580, 0
        %v1590 = vsel %vm629, %v1582, 0
        %1592 = vmatprep.subr.mxu0 0.0
        %1593 = vmatpush1.msra.mxu0 %v1584
        %1594 = vmatprep.subr.mxu0 0.0
        %1595 = vmatpush1.msra.mxu0 0.0
        %1596 = vmatprep.subr.mxu0 0.0
        %1597 = vmatpush1.msra.mxu0 0.0
        %1598 = vmatprep.subr.mxu0 0.0
        %1599 = vmatpush1.msra.mxu0 0.0
        %1600 = vmatprep.subr.mxu0 0.0
        %1601 = vmatpush1.msra.mxu0 0.0
        %1602 = vmatprep.subr.mxu0 0.0
        %1603 = vmatpush1.msra.mxu0 0.0
        %1604 = vmatprep.subr.mxu0 0.0
        %1605 = vmatpush1.msra.mxu0 0.0
        %1606 = vmatprep.subr.mxu0 0.0
        %1607 = vmatpush1.msra.mxu0 0.0
        %1608 = vmatprep.subr.mxu0 0.0
        %1609 = vmatpush1.msra.mxu0 0.0
        %1610 = vmatprep.subr.mxu0 0.0
        %1611 = vmatpush1.msra.mxu0 0.0
        %1612 = vmatprep.subr.mxu0 0.0
        %1613 = vmatpush1.msra.mxu0 0.0
        %1614 = vmatprep.subr.mxu0 0.0
        %1615 = vmatpush1.msra.mxu0 0.0
        %1616 = vmatprep.subr.mxu0 0.0
        %1617 = vmatpush1.msra.mxu0 0.0
        %1618 = vmatprep.subr.mxu0 0.0
        %1619 = vmatpush1.msra.mxu0 0.0
        %1620 = vmatprep.subr.mxu0 0.0
        %1621 = vmatpush1.msra.mxu0 0.0
        %1622 = vmatprep.subr.mxu0 0.0
        %1623 = vmatpush1.msra.mxu0 0.0
        %1624 = vmatprep.subr.mxu0 0.0
        %1625 = vmatpush1.msra.mxu0 0.0
        %1626 = vmatprep.subr.mxu0 0.0
        %1627 = vmatpush1.msra.mxu0 0.0
        %1628 = vmatprep.subr.mxu0 0.0
        %1629 = vmatpush1.msra.mxu0 0.0
        %1630 = vmatprep.subr.mxu0 0.0
        %1631 = vmatpush1.msra.mxu0 0.0
        %1632 = vmatprep.subr.mxu0 0.0
        %1633 = vmatpush1.msra.mxu0 0.0
        %1634 = vmatprep.subr.mxu0 0.0
        %1635 = vmatpush1.msra.mxu0 0.0
        %1636 = vmatprep.subr.mxu0 0.0
        %1637 = vmatpush1.msra.mxu0 0.0
        %1638 = vmatprep.subr.mxu0 0.0
        %1639 = vmatpush1.msra.mxu0 0.0
        %1640 = vmatprep.subr.mxu0 0.0
        %1641 = vmatpush1.msra.mxu0 0.0
        %1642 = vmatprep.subr.mxu0 0.0
        %1643 = vmatpush1.msra.mxu0 0.0
        %1644 = vmatprep.subr.mxu0 0.0
        %1645 = vmatpush1.msra.mxu0 0.0
        %1646 = vmatprep.subr.mxu0 0.0
        %1647 = vmatpush1.msra.mxu0 0.0
        %1648 = vmatprep.subr.mxu0 0.0
        %1649 = vmatpush1.msra.mxu0 0.0
        %1650 = vmatprep.subr.mxu0 0.0
        %1651 = vmatpush1.msra.mxu0 0.0
        %1652 = vmatprep.subr.mxu0 0.0
        %1653 = vmatpush1.msra.mxu0 0.0
        %1654 = vmatprep.subr.mxu0 0.0
        %1655 = vmatpush1.msra.mxu0 0.0
        %1656 = vmatprep.mubr.f32.mxu0 0.0
        %1657 = vmatmul.mubr.f32.gmra.mrb[0].mxu0 %v1587
        %v1658 = vpop.f32.mrb[0].mxu0
        %v1659 = vadd.f32 0.0, %v1658
        %v1660 = vpop.f32.mrb[0].mxu0
        %1661 = vmatprep.mubr.f32.mxu0 0.0
        %1662 = vmatmul.mubr.f32.gmra.mrb[0].mxu0 %v1590
        %v1663 = vpop.f32.mrb[0].mxu0
        %v1664 = vadd.f32 0.0, %v1663
        %v1665 = vpop.f32.mrb[0].mxu0
        %1666 = vdwg.mxu0
        %1667 = vrot.lane.b32.xlu0 %v1470, 112
        %v1668 = vpop.permute.xlu0 %1667
        %1669 = vrot.lane.b32.xlu0 %v1473, 112
        %v1670 = vpop.permute.xlu0 %1669
        %1671 = vrot.lane.b32.xlu0 %v1470, 88
        %v1672 = vpop.permute.xlu0 %1671
        %v1673 = vsel %vm629, %v1668, 0
        %v1675 = vsel %vm629, %v1670, 0
        %v1677 = vsel %vm629, %v1672, 0
        %1679 = vmatprep.subr.mxu0 0.0
        %1680 = vmatpush1.xpose.msra.mxu0 %v1677
        %1681 = vmatprep.subr.mxu0 0.0
        %1682 = vmatpush1.xpose.msra.mxu0 0.0
        %1683 = vmatprep.subr.mxu0 0.0
        %1684 = vmatpush1.xpose.msra.mxu0 0.0
        %1685 = vmatprep.subr.mxu0 0.0
        %1686 = vmatpush1.xpose.msra.mxu0 0.0
        %1687 = vmatprep.subr.mxu0 0.0
        %1688 = vmatpush1.xpose.msra.mxu0 0.0
        %1689 = vmatprep.subr.mxu0 0.0
        %1690 = vmatpush1.xpose.msra.mxu0 0.0
        %1691 = vmatprep.subr.mxu0 0.0
        %1692 = vmatpush1.xpose.msra.mxu0 0.0
        %1693 = vmatprep.subr.mxu0 0.0
        %1694 = vmatpush1.xpose.msra.mxu0 0.0
        %1695 = vmatprep.subr.mxu0 0.0
        %1696 = vmatpush1.xpose.msra.mxu0 0.0
        %1697 = vmatprep.subr.mxu0 0.0
        %1698 = vmatpush1.xpose.msra.mxu0 0.0
        %1699 = vmatprep.subr.mxu0 0.0
        %1700 = vmatpush1.xpose.msra.mxu0 0.0
        %1701 = vmatprep.subr.mxu0 0.0
        %1702 = vmatpush1.xpose.msra.mxu0 0.0
        %1703 = vmatprep.subr.mxu0 0.0
        %1704 = vmatpush1.xpose.msra.mxu0 0.0
        %1705 = vmatprep.subr.mxu0 0.0
        %1706 = vmatpush1.xpose.msra.mxu0 0.0
        %1707 = vmatprep.subr.mxu0 0.0
        %1708 = vmatpush1.xpose.msra.mxu0 0.0
        %1709 = vmatprep.subr.mxu0 0.0
        %1710 = vmatpush1.xpose.msra.mxu0 0.0
        %1711 = vmatprep.subr.mxu0 0.0
        %1712 = vmatpush1.xpose.msra.mxu0 0.0
        %1713 = vmatprep.subr.mxu0 0.0
        %1714 = vmatpush1.xpose.msra.mxu0 0.0
        %1715 = vmatprep.subr.mxu0 0.0
        %1716 = vmatpush1.xpose.msra.mxu0 0.0
        %1717 = vmatprep.subr.mxu0 0.0
        %1718 = vmatpush1.xpose.msra.mxu0 0.0
        %1719 = vmatprep.subr.mxu0 0.0
        %1720 = vmatpush1.xpose.msra.mxu0 0.0
        %1721 = vmatprep.subr.mxu0 0.0
        %1722 = vmatpush1.xpose.msra.mxu0 0.0
        %1723 = vmatprep.subr.mxu0 0.0
        %1724 = vmatpush1.xpose.msra.mxu0 0.0
        %1725 = vmatprep.subr.mxu0 0.0
        %1726 = vmatpush1.xpose.msra.mxu0 0.0
        %1727 = vmatprep.subr.mxu0 0.0
        %1728 = vmatpush1.xpose.msra.mxu0 0.0
        %1729 = vmatprep.subr.mxu0 0.0
        %1730 = vmatpush1.xpose.msra.mxu0 0.0
        %1731 = vmatprep.subr.mxu0 0.0
        %1732 = vmatpush1.xpose.msra.mxu0 0.0
        %1733 = vmatprep.subr.mxu0 0.0
        %1734 = vmatpush1.xpose.msra.mxu0 0.0
        %1735 = vmatprep.subr.mxu0 0.0
        %1736 = vmatpush1.xpose.msra.mxu0 0.0
        %1737 = vmatprep.subr.mxu0 0.0
        %1738 = vmatpush1.xpose.msra.mxu0 0.0
        %1739 = vmatprep.subr.mxu0 0.0
        %1740 = vmatpush1.xpose.msra.mxu0 0.0
        %1741 = vmatprep.subr.mxu0 0.0
        %1742 = vmatpush1.xpose.msra.mxu0 0.0
        %1743 = vmatprep.mubr.f32.mxu0 0.0
        %1744 = vmatmul.mubr.f32.gmra.mrb[0].mxu0 %v1673
        %v1745 = vpop.f32.mrb[0].mxu0
        %v1746 = vadd.f32 0.0, %v1745
        %v1747 = vpop.f32.mrb[0].mxu0
        %1748 = vmatprep.mubr.f32.mxu0 0.0
        %1749 = vmatmul.mubr.f32.gmra.mrb[0].mxu0 %v1675
        %v1750 = vpop.f32.mrb[0].mxu0
        %v1751 = vadd.f32 0.0, %v1750
        %v1752 = vpop.f32.mrb[0].mxu0
        %1753 = vdwg.mxu0
        %v1754 = vmul.f32 %v1746, 0.35355338
        %v1755 = vmul.f32 %v1751, 0.35355338
        %v1756 = vadd.f32 %v1754, %v450
        %v1757 = vadd.f32 %v1755, %v451
        %v1758 = vsel %vm629, %v1756, -inf
        %1759 = vmax.xlane.f32.xlu0 %v1758
        %v1760 = vpop.xlane.xlu0 %1759
        %v1761 = vsel %vm629, %v1757, -inf
        %1762 = vmax.xlane.f32.xlu0 %v1761
        %v1763 = vpop.xlane.xlu0 %1762
        %v1764 = vsub.f32 %v1756, %v1760
        %v1765 = vsub.f32 %v1757, %v1763
        %v1766 = vmul.f32 %v1764, 1.442695
        %v1767 = vpow.pop %v1766
        %v1768 = vmul.f32 %v1765, 1.442695
        %v1769 = vpow.pop %v1768
        %v1770 = vsel %vm629, %v1767, 0.0
        %1771 = vadd.xlane.f32.xlu0 %v1770
        %v1772 = vpop.xlane.xlu0 %1771
        %v1773 = vsel %vm629, %v1769, 0.0
        %1774 = vadd.xlane.f32.xlu0 %v1773
        %v1775 = vpop.xlane.xlu0 %1774
        %v1776 = vrcp.pop %v1772
        %v1777 = vmul.f32 %v1767, %v1776
        %v1778 = vrcp.pop %v1775
        %v1779 = vmul.f32 %v1769, %v1778
        %1780 = vrot.lane.b32.xlu0 %v1392, 72
        %v1781 = vpop.permute.xlu0 %1780
        %v1784 = vsel %vm629, %v1777, 0
        %v1787 = vsel %vm629, %v1779, 0
        %1789 = vmatprep.subr.mxu0 0.0
        %1790 = vmatpush1.msra.mxu0 %v1781
        %1791 = vmatprep.subr.mxu0 0.0
        %1792 = vmatpush1.msra.mxu0 0.0
        %1793 = vmatprep.subr.mxu0 0.0
        %1794 = vmatpush1.msra.mxu0 0.0
        %1795 = vmatprep.subr.mxu0 0.0
        %1796 = vmatpush1.msra.mxu0 0.0
        %1797 = vmatprep.subr.mxu0 0.0
        %1798 = vmatpush1.msra.mxu0 0.0
        %1799 = vmatprep.subr.mxu0 0.0
        %1800 = vmatpush1.msra.mxu0 0.0
        %1801 = vmatprep.subr.mxu0 0.0
        %1802 = vmatpush1.msra.mxu0 0.0
        %1803 = vmatprep.subr.mxu0 0.0
        %1804 = vmatpush1.msra.mxu0 0.0
        %1805 = vmatprep.subr.mxu0 0.0
        %1806 = vmatpush1.msra.mxu0 0.0
        %1807 = vmatprep.subr.mxu0 0.0
        %1808 = vmatpush1.msra.mxu0 0.0
        %1809 = vmatprep.subr.mxu0 0.0
        %1810 = vmatpush1.msra.mxu0 0.0
        %1811 = vmatprep.subr.mxu0 0.0
        %1812 = vmatpush1.msra.mxu0 0.0
        %1813 = vmatprep.subr.mxu0 0.0
        %1814 = vmatpush1.msra.mxu0 0.0
        %1815 = vmatprep.subr.mxu0 0.0
        %1816 = vmatpush1.msra.mxu0 0.0
        %1817 = vmatprep.subr.mxu0 0.0
        %1818 = vmatpush1.msra.mxu0 0.0
        %1819 = vmatprep.subr.mxu0 0.0
        %1820 = vmatpush1.msra.mxu0 0.0
        %1821 = vmatprep.subr.mxu0 0.0
        %1822 = vmatpush1.msra.mxu0 0.0
        %1823 = vmatprep.subr.mxu0 0.0
        %1824 = vmatpush1.msra.mxu0 0.0
        %1825 = vmatprep.subr.mxu0 0.0
        %1826 = vmatpush1.msra.mxu0 0.0
        %1827 = vmatprep.subr.mxu0 0.0
        %1828 = vmatpush1.msra.mxu0 0.0
        %1829 = vmatprep.subr.mxu0 0.0
        %1830 = vmatpush1.msra.mxu0 0.0
        %1831 = vmatprep.subr.mxu0 0.0
        %1832 = vmatpush1.msra.mxu0 0.0
        %1833 = vmatprep.subr.mxu0 0.0
        %1834 = vmatpush1.msra.mxu0 0.0
        %1835 = vmatprep.subr.mxu0 0.0
        %1836 = vmatpush1.msra.mxu0 0.0
        %1837 = vmatprep.subr.mxu0 0.0
        %1838 = vmatpush1.msra.mxu0 0.0
        %1839 = vmatprep.subr.mxu0 0.0
        %1840 = vmatpush1.msra.mxu0 0.0
        %1841 = vmatprep.subr.mxu0 0.0
        %1842 = vmatpush1.msra.mxu0 0.0
        %1843 = vmatprep.subr.mxu0 0.0
        %1844 = vmatpush1.msra.mxu0 0.0
        %1845 = vmatprep.subr.mxu0 0.0
        %1846 = vmatpush1.msra.mxu0 0.0
        %1847 = vmatprep.subr.mxu0 0.0
        %1848 = vmatpush1.msra.mxu0 0.0
        %1849 = vmatprep.subr.mxu0 0.0
        %1850 = vmatpush1.msra.mxu0 0.0
        %1851 = vmatprep.subr.mxu0 0.0
        %1852 = vmatpush1.msra.mxu0 0.0
        %1853 = vmatprep.mubr.f32.mxu0 0.0
        %1854 = vmatmul.mubr.f32.gmra.mrb[0].mxu0 %v1784
        %v1855 = vpop.f32.mrb[0].mxu0
        %v1856 = vadd.f32 0.0, %v1855
        %v1857 = vpop.f32.mrb[0].mxu0
        %1858 = vmatprep.mubr.f32.mxu0 0.0
        %1859 = vmatmul.mubr.f32.gmra.mrb[0].mxu0 %v1787
        %v1860 = vpop.f32.mrb[0].mxu0
        %v1861 = vadd.f32 0.0, %v1860
        %v1862 = vpop.f32.mrb[0].mxu0
        %1863 = vdwg.mxu0
        %1865 = vrot.lane.b32.xlu0 %v1664, 8
        %v1866 = vpop.permute.xlu0 %1865
        %1869 = vrot.lane.b32.xlu0 %v1856, 16
        %v1870 = vpop.permute.xlu0 %1869
        %1873 = vrot.lane.b32.xlu0 %v1861, 24
        %v1874 = vpop.permute.xlu0 %1873
        %v1876 = vsel %vm629, %v1659, %v1866
        %v1877 = vsel %vm1031, %v1876, %v1870
        %v1878 = vsel %vm1033, %v1877, %v1874
        %s1879 = scalar_lea.vmem %s3, 32
        %v1880 = vld [vmem:[%s1879] sm:$0xff]
        %v1881 = vld [vmem:[%s1879 + $0x8] sm:$0xff]
        %v1882 = vld [vmem:[%s1879 + $0x10] sm:$0xff]
        %v1883 = vld [vmem:[%s1879 + $0x18] sm:$0xff]
        %v1885 = vsel %vm454, %v1878, 0
        %1887 = vmatprep.subr.mxu0 0.0
        %1888 = vmatpush1.msra.mxu0 %v1880
        %1889 = vmatprep.subr.mxu0 0.0
        %1890 = vmatpush1.msra.mxu0 %v1881
        %1891 = vmatprep.subr.mxu0 0.0
        %1892 = vmatpush1.msra.mxu0 %v1882
        %1893 = vmatprep.subr.mxu0 0.0
        %1894 = vmatpush1.msra.mxu0 %v1883
        %1895 = vmatprep.subr.mxu0 0.0
        %1896 = vmatpush1.msra.mxu0 0.0
        %1897 = vmatprep.subr.mxu0 0.0
        %1898 = vmatpush1.msra.mxu0 0.0
        %1899 = vmatprep.subr.mxu0 0.0
        %1900 = vmatpush1.msra.mxu0 0.0
        %1901 = vmatprep.subr.mxu0 0.0
        %1902 = vmatpush1.msra.mxu0 0.0
        %1903 = vmatprep.subr.mxu0 0.0
        %1904 = vmatpush1.msra.mxu0 0.0
        %1905 = vmatprep.subr.mxu0 0.0
        %1906 = vmatpush1.msra.mxu0 0.0
        %1907 = vmatprep.subr.mxu0 0.0
        %1908 = vmatpush1.msra.mxu0 0.0
        %1909 = vmatprep.subr.mxu0 0.0
        %1910 = vmatpush1.msra.mxu0 0.0
        %1911 = vmatprep.subr.mxu0 0.0
        %1912 = vmatpush1.msra.mxu0 0.0
        %1913 = vmatprep.subr.mxu0 0.0
        %1914 = vmatpush1.msra.mxu0 0.0
        %1915 = vmatprep.subr.mxu0 0.0
        %1916 = vmatpush1.msra.mxu0 0.0
        %1917 = vmatprep.subr.mxu0 0.0
        %1918 = vmatpush1.msra.mxu0 0.0
        %1919 = vmatprep.subr.mxu0 0.0
        %1920 = vmatpush1.msra.mxu0 0.0
        %1921 = vmatprep.subr.mxu0 0.0
        %1922 = vmatpush1.msra.mxu0 0.0
        %1923 = vmatprep.subr.mxu0 0.0
        %1924 = vmatpush1.msra.mxu0 0.0
        %1925 = vmatprep.subr.mxu0 0.0
        %1926 = vmatpush1.msra.mxu0 0.0
        %1927 = vmatprep.subr.mxu0 0.0
        %1928 = vmatpush1.msra.mxu0 0.0
        %1929 = vmatprep.subr.mxu0 0.0
        %1930 = vmatpush1.msra.mxu0 0.0
        %1931 = vmatprep.subr.mxu0 0.0
        %1932 = vmatpush1.msra.mxu0 0.0
        %1933 = vmatprep.subr.mxu0 0.0
        %1934 = vmatpush1.msra.mxu0 0.0
        %1935 = vmatprep.subr.mxu0 0.0
        %1936 = vmatpush1.msra.mxu0 0.0
        %1937 = vmatprep.subr.mxu0 0.0
        %1938 = vmatpush1.msra.mxu0 0.0
        %1939 = vmatprep.subr.mxu0 0.0
        %1940 = vmatpush1.msra.mxu0 0.0
        %1941 = vmatprep.subr.mxu0 0.0
        %1942 = vmatpush1.msra.mxu0 0.0
        %1943 = vmatprep.subr.mxu0 0.0
        %1944 = vmatpush1.msra.mxu0 0.0
        %1945 = vmatprep.subr.mxu0 0.0
        %1946 = vmatpush1.msra.mxu0 0.0
        %1947 = vmatprep.subr.mxu0 0.0
        %1948 = vmatpush1.msra.mxu0 0.0
        %1949 = vmatprep.subr.mxu0 0.0
        %1950 = vmatpush1.msra.mxu0 0.0
        %1951 = vmatprep.mubr.f32.mxu0 0.0
        %1952 = vmatmul.mubr.f32.gmra.mrb[0].mxu0 %v1885
        %v1953 = vpop.f32.mrb[0].mxu0
        %v1954 = vadd.f32 0.0, %v1953
        %v1955 = vpop.f32.mrb[0].mxu0
        %1956 = vdwg.mxu0
        %v1957 = vadd.f32 %v1299, %v1954
        %s1958 = scalar_lea.vmem [#allocation2], 1
        %v1959 = vld [vmem:[%s1958] sm:$0x1]
        %v1960 = vmul.f32 %v1957, %v1957
        %v1961 = vsel %vm454, %v1960, 0.0
        %1962 = vadd.xlane.f32.xlu0 %v1961
        %v1963 = vpop.xlane.xlu0 %1962
        %v1964 = vmul.f32 %v1963, %v458
        %v1965 = vadd.f32 %v1964, 1e-06
        %v1966 = vrsqrt.pop %v1965
        %v1967 = vmul.f32 %v1957, %v1966
        %v1969 = vlaneseq
        %v1970 = vshrl.u32 %v1969, 7
        %v1971 = vsub.s32 0, %v1970
        %v1972 = vrot.slane %v1959, %v1971
        %v1974 = vmul.f32 %v1967, %v1972
        %s1975 = scalar_lea.vmem %s5, 32
        %v1976 = vld [vmem:[%s1975] sm:$0xff]
        %v1977 = vld [vmem:[%s1975 + $0x8] sm:$0xff]
        %v1978 = vld [vmem:[%s1975 + $0x10] sm:$0xff]
        %v1979 = vld [vmem:[%s1975 + $0x18] sm:$0xff]
        %v1981 = vsel %vm454, %v1974, 0
        %1983 = vmatprep.subr.mxu0 0.0
        %1984 = vmatpush1.msra.mxu0 %v1976
        %1985 = vmatprep.subr.mxu0 0.0
        %1986 = vmatpush1.msra.mxu0 %v1977
        %1987 = vmatprep.subr.mxu0 0.0
        %1988 = vmatpush1.msra.mxu0 %v1978
        %1989 = vmatprep.subr.mxu0 0.0
        %1990 = vmatpush1.msra.mxu0 %v1979
        %1991 = vmatprep.subr.mxu0 0.0
        %1992 = vmatpush1.msra.mxu0 0.0
        %1993 = vmatprep.subr.mxu0 0.0
        %1994 = vmatpush1.msra.mxu0 0.0
        %1995 = vmatprep.subr.mxu0 0.0
        %1996 = vmatpush1.msra.mxu0 0.0
        %1997 = vmatprep.subr.mxu0 0.0
        %1998 = vmatpush1.msra.mxu0 0.0
        %1999 = vmatprep.subr.mxu0 0.0
        %2000 = vmatpush1.msra.mxu0 0.0
        %2001 = vmatprep.subr.mxu0 0.0
        %2002 = vmatpush1.msra.mxu0 0.0
        %2003 = vmatprep.subr.mxu0 0.0
        %2004 = vmatpush1.msra.mxu0 0.0
        %2005 = vmatprep.subr.mxu0 0.0
        %2006 = vmatpush1.msra.mxu0 0.0
        %2007 = vmatprep.subr.mxu0 0.0
        %2008 = vmatpush1.msra.mxu0 0.0
        %2009 = vmatprep.subr.mxu0 0.0
        %2010 = vmatpush1.msra.mxu0 0.0
        %2011 = vmatprep.subr.mxu0 0.0
        %2012 = vmatpush1.msra.mxu0 0.0
        %2013 = vmatprep.subr.mxu0 0.0
        %2014 = vmatpush1.msra.mxu0 0.0
        %2015 = vmatprep.subr.mxu0 0.0
        %2016 = vmatpush1.msra.mxu0 0.0
        %2017 = vmatprep.subr.mxu0 0.0
        %2018 = vmatpush1.msra.mxu0 0.0
        %2019 = vmatprep.subr.mxu0 0.0
        %2020 = vmatpush1.msra.mxu0 0.0
        %2021 = vmatprep.subr.mxu0 0.0
        %2022 = vmatpush1.msra.mxu0 0.0
        %2023 = vmatprep.subr.mxu0 0.0
        %2024 = vmatpush1.msra.mxu0 0.0
        %2025 = vmatprep.subr.mxu0 0.0
        %2026 = vmatpush1.msra.mxu0 0.0
        %2027 = vmatprep.subr.mxu0 0.0
        %2028 = vmatpush1.msra.mxu0 0.0
        %2029 = vmatprep.subr.mxu0 0.0
        %2030 = vmatpush1.msra.mxu0 0.0
        %2031 = vmatprep.subr.mxu0 0.0
        %2032 = vmatpush1.msra.mxu0 0.0
        %2033 = vmatprep.subr.mxu0 0.0
        %2034 = vmatpush1.msra.mxu0 0.0
        %2035 = vmatprep.subr.mxu0 0.0
        %2036 = vmatpush1.msra.mxu0 0.0
        %2037 = vmatprep.subr.mxu0 0.0
        %2038 = vmatpush1.msra.mxu0 0.0
        %2039 = vmatprep.subr.mxu0 0.0
        %2040 = vmatpush1.msra.mxu0 0.0
        %2041 = vmatprep.subr.mxu0 0.0
        %2042 = vmatpush1.msra.mxu0 0.0
        %2043 = vmatprep.subr.mxu0 0.0
        %2044 = vmatpush1.msra.mxu0 0.0
        %2045 = vmatprep.subr.mxu0 0.0
        %2046 = vmatpush1.msra.mxu0 0.0
        %2047 = vmatprep.mubr.f32.mxu0 0.0
        %2048 = vmatmul.mubr.f32.gmra.mrb[0].mxu0 %v1981
        %v2049 = vpop.f32.mrb[0].mxu0
        %v2050 = vadd.f32 0.0, %v2049
        %v2051 = vpop.f32.mrb[0].mxu0
        %2052 = vdwg.mxu0
        %v2053 = vxor.u32 %v2050, 2147483648
        %v2054 = vmul.f32 %v2053, 1.442695
        %v2055 = vpow.pop %v2054
        %v2056 = vadd.f32 %v2055, 1.0
        %v2057 = vrcp.pop %v2056
        %v2058 = vmul.f32 1.0, %v2057
        %v2059 = vmul.f32 %v2050, %v2058
        %2061 = vrot.lane.b32.xlu0 %v2050, 64
        %v2062 = vpop.permute.xlu0 %2061
        %v2064 = vmul.f32 %v2059, %v2062
        %s2065 = scalar_lea.vmem %s6, 64
        %v2066 = vld [vmem:[%s2065] sm:$0xff]
        %v2067 = vld [vmem:[%s2065 + $0x8] sm:$0xff]
        %v2068 = vld [vmem:[%s2065 + $0x10] sm:$0xff]
        %v2069 = vld [vmem:[%s2065 + $0x18] sm:$0xff]
        %v2070 = vld [vmem:[%s2065 + $0x20] sm:$0xff]
        %v2071 = vld [vmem:[%s2065 + $0x28] sm:$0xff]
        %v2072 = vld [vmem:[%s2065 + $0x30] sm:$0xff]
        %v2073 = vld [vmem:[%s2065 + $0x38] sm:$0xff]
        %v2075 = vsel %vm548, %v2064, 0
        %2077 = vmatprep.subr.mxu0 0.0
        %2078 = vmatpush1.msra.mxu0 %v2066
        %2079 = vmatprep.subr.mxu0 0.0
        %2080 = vmatpush1.msra.mxu0 %v2067
        %2081 = vmatprep.subr.mxu0 0.0
        %2082 = vmatpush1.msra.mxu0 %v2068
        %2083 = vmatprep.subr.mxu0 0.0
        %2084 = vmatpush1.msra.mxu0 %v2069
        %2085 = vmatprep.subr.mxu0 0.0
        %2086 = vmatpush1.msra.mxu0 %v2070
        %2087 = vmatprep.subr.mxu0 0.0
        %2088 = vmatpush1.msra.mxu0 %v2071
        %2089 = vmatprep.subr.mxu0 0.0
        %2090 = vmatpush1.msra.mxu0 %v2072
        %2091 = vmatprep.subr.mxu0 0.0
        %2092 = vmatpush1.msra.mxu0 %v2073
        %2093 = vmatprep.subr.mxu0 0.0
        %2094 = vmatpush1.msra.mxu0 0.0
        %2095 = vmatprep.subr.mxu0 0.0
        %2096 = vmatpush1.msra.mxu0 0.0
        %2097 = vmatprep.subr.mxu0 0.0
        %2098 = vmatpush1.msra.mxu0 0.0
        %2099 = vmatprep.subr.mxu0 0.0
        %2100 = vmatpush1.msra.mxu0 0.0
        %2101 = vmatprep.subr.mxu0 0.0
        %2102 = vmatpush1.msra.mxu0 0.0
        %2103 = vmatprep.subr.mxu0 0.0
        %2104 = vmatpush1.msra.mxu0 0.0
        %2105 = vmatprep.subr.mxu0 0.0
        %2106 = vmatpush1.msra.mxu0 0.0
        %2107 = vmatprep.subr.mxu0 0.0
        %2108 = vmatpush1.msra.mxu0 0.0
        %2109 = vmatprep.subr.mxu0 0.0
        %2110 = vmatpush1.msra.mxu0 0.0
        %2111 = vmatprep.subr.mxu0 0.0
        %2112 = vmatpush1.msra.mxu0 0.0
        %2113 = vmatprep.subr.mxu0 0.0
        %2114 = vmatpush1.msra.mxu0 0.0
        %2115 = vmatprep.subr.mxu0 0.0
        %2116 = vmatpush1.msra.mxu0 0.0
        %2117 = vmatprep.subr.mxu0 0.0
        %2118 = vmatpush1.msra.mxu0 0.0
        %2119 = vmatprep.subr.mxu0 0.0
        %2120 = vmatpush1.msra.mxu0 0.0
        %2121 = vmatprep.subr.mxu0 0.0
        %2122 = vmatpush1.msra.mxu0 0.0
        %2123 = vmatprep.subr.mxu0 0.0
        %2124 = vmatpush1.msra.mxu0 0.0
        %2125 = vmatprep.subr.mxu0 0.0
        %2126 = vmatpush1.msra.mxu0 0.0
        %2127 = vmatprep.subr.mxu0 0.0
        %2128 = vmatpush1.msra.mxu0 0.0
        %2129 = vmatprep.subr.mxu0 0.0
        %2130 = vmatpush1.msra.mxu0 0.0
        %2131 = vmatprep.subr.mxu0 0.0
        %2132 = vmatpush1.msra.mxu0 0.0
        %2133 = vmatprep.subr.mxu0 0.0
        %2134 = vmatpush1.msra.mxu0 0.0
        %2135 = vmatprep.subr.mxu0 0.0
        %2136 = vmatpush1.msra.mxu0 0.0
        %2137 = vmatprep.subr.mxu0 0.0
        %2138 = vmatpush1.msra.mxu0 0.0
        %2139 = vmatprep.subr.mxu0 0.0
        %2140 = vmatpush1.msra.mxu0 0.0
        %2141 = vmatprep.mubr.f32.mxu0 0.0
        %2142 = vmatmul.mubr.f32.gmra.mrb[0].mxu0 %v2075
        %v2143 = vpop.f32.mrb[0].mxu0
        %v2144 = vadd.f32 0.0, %v2143
        %v2145 = vpop.f32.mrb[0].mxu0
        %2146 = vdwg.mxu0
        %v2147 = vadd.f32 %v1957, %v2144
        %v2148 = vld [vmem:[%s11] sm:$0x1]
        %v2149 = vmul.f32 %v2147, %v2147
        %v2150 = vsel %vm454, %v2149, 0.0
        %2151 = vadd.xlane.f32.xlu0 %v2150
        %v2152 = vpop.xlane.xlu0 %2151
        %v2153 = vmul.f32 %v2152, %v458
        %v2154 = vadd.f32 %v2153, 1e-06
        %v2155 = vrsqrt.pop %v2154
        %v2156 = vmul.f32 %v2147, %v2155
        %v2158 = vlaneseq
        %v2159 = vshrl.u32 %v2158, 7
        %v2160 = vsub.s32 0, %v2159
        %v2161 = vrot.slane %v2148, %v2160
        %v2163 = vmul.f32 %v2156, %v2161
        %2165 = vrot.lane.b32.xlu0 %v1299, 32
        %v2166 = vpop.permute.xlu0 %2165
        %2169 = vrot.lane.b32.xlu0 %v2147, 64
        %v2170 = vpop.permute.xlu0 %2169
        %2173 = vrot.lane.b32.xlu0 %v2163, 96
        %v2174 = vpop.permute.xlu0 %2173
        %v2176 = vsel %vm454, %v439, %v2166
        %v2177 = vsel %vm548, %v2176, %v2170
        %vm2178 = vcmask 785408
        %v2179 = vsel %vm2178, %v2177, %v2174
        %2180 = vst [vmem:[%s434] sm:$0xff] %v2179
        %s2181 = sand.u32 %s293, 1
        %s2182 = scalar_lea.sflag [#allocation4], %s2181
        %s2183 = sand.u32 %s293, 1
        %s2184 = smul.addr %s2183, 8
        %s2185 = scalar_lea.vmem [#allocation7], %s2184
        // Predicated region
        $region77: #{tpu_custom_call.1} parent=67 // pred_check
          %p2186 = pneg %p303
        $region78: #{tpu_custom_call.1} parent=67 // pred_check_branch
          %2188 = sbr.rel (%p2186) target = $region80
        $region79: #{tpu_custom_call.1} parent=67 // pred_region
          %s2190 = ssub.s32 128, 128
          %2191 = vsyncadd %s2182, %s2190
          %s2192 = smul.addr %s28, 128
          %s2193 = scalar_lea.hbm %s12, %s2192
          %s2195 = sshll.u32 %s2185, 4
          %s2196 = int_to_ptr.vmem [resolvable:$true] %s2195
          %2198 = dma.vmem_to_hbm [thread:$0]  %s2196, 128, %s2193, %s2182
        $region80: #{tpu_custom_call.1} parent=67 // pred_fallthru
          _
      $region68: #{tpu_custom_call.1} parent=5 // pred_fallthru
        _
      %p2199 = scmp.le.s32.totalorder 2, %s23
      // Predicated region
      $region81: #{tpu_custom_call.1} parent=5 // pred_check
        %p2200 = pneg %p2199
      $region82: #{tpu_custom_call.1} parent=5 // pred_check_branch
        %2202 = sbr.rel (%p2200) target = $region84
      $region83: #{tpu_custom_call.1} parent=5 // pred_region
        %s2203 = ssub.s32 %s23, 2
        // Predicated region
        $region85: #{tpu_custom_call.1} parent=83 // pred_check
          %p2204 = pneg %p309
        $region86: #{tpu_custom_call.1} parent=83 // pred_check_branch
          %2206 = sbr.rel (%p2204) target = $region88
        $region87: #{tpu_custom_call.1} parent=83 // pred_region
          %s2207 = sand.u32 %s294, 1
          %s2208 = scalar_lea.sflag [#allocation4], %s2207
          %s2209 = sand.u32 %s294, 1
          %s2210 = smul.addr %s2209, 8
          %s2211 = scalar_lea.vmem [#allocation7], %s2210
          %2212 = dma.done %s2208, 128
        $region88: #{tpu_custom_call.1} parent=83 // pred_fallthru
          _
      $region84: #{tpu_custom_call.1} parent=5 // pred_fallthru
        _
    $region6: #{tpu_custom_call.1} parent=1 // loop_footer
      %s27 = sadd.s32 1, %s23
    $region7: #{tpu_custom_call.1} parent=1 // loop_footer_branch
      %22 = sbr.rel target = $region3
    $region8: #{tpu_custom_call.1} parent=1 // loop_exit
      _
    %2213 = vsyncpa [#allocation3], 1
    %s2214 = scalar_lea.sflag [#allocation3], 1
    %2215 = vsyncpa %s2214, 1
    %2216 = vsyncpa [#allocation6], 1
    %2217 = vsyncpa [#allocation4], 1
    %s2218 = scalar_lea.sflag [#allocation4], 1
    %2219 = vsyncpa %s2218, 1

</llo_original>
